<compile_context>
chip_gen: v7x
topology: tpu7x:2x2x1
jax: 0.10.0
libtpu: 0.0.40
codegen_flags: <defaults>
</compile_context>

<pallas_src>
import functools
import math

import jax
import jax.numpy as jnp
from jax import lax
from jax.experimental import pallas as pl
from jax.experimental.pallas import tpu as pltpu


def _fused_attention_kernel(x_ref, wqkv_ref, wout_ref, o_ref, *, num_heads, scale):
    """One batch element per grid step.

    Shapes inside the kernel:
      x_ref    : (1, L, C)
      wqkv_ref : (3C, C)   (PyTorch Linear layout: out_features x in_features)
      wout_ref : (C, C)
      o_ref    : (1, L, C)
    """
    L, C = x_ref.shape[1], x_ref.shape[2]
    H = num_heads
    D = C // H
    cdt = x_ref.dtype                          # MXU input dtype (f32 or bf16)
    trans_b = (((1,), (1,)), ((), ()))         # contract last axes; no explicit .T

    x = x_ref[0]                                                    # (L, C)

    # qkv projection: (L, C) x (3C, C)^T -> (L, 3C), f32 accumulation.
    qkv = lax.dot_general(x, wqkv_ref[...], trans_b,
                          preferred_element_type=jnp.float32)       # (L, 3C) f32

    # Last dim of qkv is ordered (qkv, h, d): q | k | v, each (L, C) = (L, H*D).
    # Fold the softmax scale into q once (cheaper than scaling the (L, L) logits).
    q = (qkv[:, 0 * C:1 * C] * scale).astype(cdt)
    k = qkv[:, 1 * C:2 * C].astype(cdt)
    v = qkv[:, 2 * C:3 * C].astype(cdt)

    # Per-head attention. H is small & static -> unrolled python loop; head
    # outputs are concatenated back to a lane-dense (L, C) tile before the
    # output projection and the single (L, C) store.
    head_outs = []
    for h in range(H):
        qh = q[:, h * D:(h + 1) * D]                                # (L, D)
        kh = k[:, h * D:(h + 1) * D]
        vh = v[:, h * D:(h + 1) * D]
        s = lax.dot_general(qh, kh, trans_b,
                            preferred_element_type=jnp.float32)     # (L, L) f32
        m = jnp.max(s, axis=-1, keepdims=True)
        p = jnp.exp(s - m)
        denom = jnp.sum(p, axis=-1, keepdims=True)
        p = p * pl.reciprocal(denom, approx=True)                   # EUP divide
        head_outs.append(
            jnp.dot(p.astype(cdt), vh, preferred_element_type=jnp.float32))

    attn = jnp.concatenate(head_outs, axis=-1).astype(cdt)          # (L, C)

    # Output projection: (L, C) x (C, C)^T -> (L, C).
    out = lax.dot_general(attn, wout_ref[...], trans_b,
                          preferred_element_type=jnp.float32)
    # attn_dropout / out_dropout are identity in eval mode.
    o_ref[0] = out.astype(o_ref.dtype)


def attention_forward(x, w_qkv, w_out, num_heads, *, compute_dtype=None):
    """
    x:      (B, L, C)
    w_qkv:  (3*C, C)  PyTorch Linear weight layout (out_features, in_features)
    w_out:  (C, C)
    compute_dtype: dtype fed to the MXU (e.g. jnp.bfloat16). Softmax and all
        matmul accumulation stay in f32; the output keeps x's original dtype.
    """
    B, L, C = x.shape
    H = num_heads
    assert C % H == 0
    D = C // H
    scale = D ** (-0.5)
    out_dtype = x.dtype

    if compute_dtype is not None:
        x = x.astype(compute_dtype)
        w_qkv = w_qkv.astype(compute_dtype)
        w_out = w_out.astype(compute_dtype)

    kern = functools.partial(_fused_attention_kernel, num_heads=H, scale=scale)

    in_bytes = jnp.dtype(x.dtype).itemsize
    cost = pl.CostEstimate(
        flops=B * (2 * L * C * 3 * C          # qkv projection
                   + 2 * 2 * L * L * C        # q@k^T and p@v over all heads
                   + 2 * L * C * C),          # output projection
        transcendentals=B * H * L * L,        # exp in softmax
        bytes_accessed=(B * L * C * in_bytes                 # x
                        + 3 * C * C * in_bytes               # w_qkv
                        + C * C * in_bytes                   # w_out
                        + B * L * C * jnp.dtype(out_dtype).itemsize),
    )

    # NOTE: each grid step materializes one (L, L) f32 score matrix per head.
    # For long sequences (L >~ 2K, especially v7x's 64 MiB VMEM) this should be
    # replaced by a KV-tiled online-softmax (flash) loop; unnecessary here.
    return pl.pallas_call(
        kern,
        out_shape=jax.ShapeDtypeStruct((B, L, C), out_dtype),
        grid=(B,),
        in_specs=[
            pl.BlockSpec((1, L, C), lambda b: (b, 0, 0)),      # per-batch x tile
            pl.BlockSpec((3 * C, C), lambda b: (0, 0)),        # weights stay resident
            pl.BlockSpec((C, C), lambda b: (0, 0)),
        ],
        out_specs=pl.BlockSpec((1, L, C), lambda b: (b, 0, 0)),
        compiler_params=pltpu.CompilerParams(
            dimension_semantics=("parallel",),                 # megacore split on v7x
        ),
        cost_estimate=cost,
    )(x, w_qkv, w_out)


def _reference_forward(x, w_qkv, w_out, num_heads):
    """Pure-JAX f32 reference matching the PyTorch module in eval mode."""
    B, L, C = x.shape
    H = num_heads
    D = C // H
    qkv = (x @ w_qkv.T).reshape(B, L, 3, H, D)
    q, k, v = qkv[:, :, 0], qkv[:, :, 1], qkv[:, :, 2]          # (B, L, H, D)
    s = jnp.einsum("blhd,bmhd->bhlm", q, k) * (D ** -0.5)
    p = jax.nn.softmax(s, axis=-1)
    o = jnp.einsum("bhlm,bmhd->blhd", p, v).reshape(B, L, C)
    return o @ w_out.T


if __name__ == "__main__":
    B, L, dim, num_heads = 2, 8, 32, 8

    key = jax.random.PRNGKey(0)
    kx, kq, ko = jax.random.split(key, 3)

    x = jax.random.normal(kx, (B, L, dim), dtype=jnp.float32)

    # PyTorch Linear default init: U(-1/sqrt(fan_in), 1/sqrt(fan_in))
    bound = 1.0 / math.sqrt(dim)
    w_qkv = jax.random.uniform(kq, (3 * dim, dim), jnp.float32, -bound, bound)
    w_out = jax.random.uniform(ko, (dim, dim), jnp.float32, -bound, bound)

    # Optimized path: bf16 MXU inputs, f32 accumulation / softmax, f32 output.
    y = attention_forward(x, w_qkv, w_out, num_heads, compute_dtype=jnp.bfloat16)
    y = jax.block_until_ready(y)

    ref = _reference_forward(x, w_qkv, w_out, num_heads)

    assert y.shape == (B, L, dim)
    assert jnp.all(jnp.isfinite(y))
    assert jnp.allclose(y, ref, atol=5e-2, rtol=5e-2), float(jnp.max(jnp.abs(y - ref)))
    print("KERNEL_OK")
</pallas_src>

<mosaic_0001>
module attributes {stable_mosaic.version = 11 : i64} {
  func.func @_fused_attention_kernel(%arg0: i32, %arg1: memref<1x8x32xbf16, #tpu.memory_space<vmem>>, %arg2: memref<96x32xbf16, #tpu.memory_space<vmem>>, %arg3: memref<32x32xbf16, #tpu.memory_space<vmem>>, %arg4: memref<1x8x32xf32, #tpu.memory_space<vmem>>) attributes {dimension_semantics = [#tpu.dimension_semantics<parallel>], iteration_bounds = array<i64: 2>, scalar_prefetch = 0 : i64, scratch_operands = 0 : i64, tpu.core_type = #tpu.core_type<tc>, window_params = [{transform_indices = @transform_0, window_bounds = array<i64: 1, 8, 32>}, {pipeline_mode = #tpu.pipeline_mode<synchronous>, transform_indices = @transform_1, window_bounds = array<i64: 96, 32>}, {pipeline_mode = #tpu.pipeline_mode<synchronous>, transform_indices = @transform_2, window_bounds = array<i64: 32, 32>}, {transform_indices = @transform_3, window_bounds = array<i64: 1, 8, 32>}]} {
    %c0 = arith.constant 0 : index
    %c0_0 = arith.constant 0 : index
    %c0_1 = arith.constant 0 : index
    %0 = vector.load %arg1[%c0, %c0_0, %c0_1] : memref<1x8x32xbf16, #tpu.memory_space<vmem>>, vector<1x8x32xbf16>
    %1 = vector.shape_cast %0 : vector<1x8x32xbf16> to vector<8x32xbf16>
    %c0_2 = arith.constant 0 : index
    %c0_3 = arith.constant 0 : index
    %2 = vector.load %arg2[%c0_2, %c0_3] : memref<96x32xbf16, #tpu.memory_space<vmem>>, vector<96x32xbf16>
    %cst = arith.constant dense<0.000000e+00> : vector<8x96xf32>
    %3 = tpu.matmul %1, %2, %cst {dimension_numbers = #tpu.dot_dimension_numbers<[1], [1], [0], [0], [0, 0, 1, 0], [], []>} : vector<8x32xbf16>, vector<96x32xbf16>, vector<8x96xf32> -> vector<8x96xf32>
    %4 = vector.extract_strided_slice %3 {offsets = [0, 0], sizes = [8, 32], strides = [1, 1]} : vector<8x96xf32> to vector<8x32xf32>
    %cst_4 = arith.constant 5.000000e-01 : f32
    %5 = vector.broadcast %cst_4 : f32 to vector<8x32xf32>
    %6 = arith.mulf %4, %5 : vector<8x32xf32>
    %7 = arith.truncf %6 : vector<8x32xf32> to vector<8x32xbf16>
    %8 = vector.extract_strided_slice %3 {offsets = [0, 32], sizes = [8, 32], strides = [1, 1]} : vector<8x96xf32> to vector<8x32xf32>
    %9 = arith.truncf %8 : vector<8x32xf32> to vector<8x32xbf16>
    %10 = vector.extract_strided_slice %3 {offsets = [0, 64], sizes = [8, 32], strides = [1, 1]} : vector<8x96xf32> to vector<8x32xf32>
    %11 = arith.truncf %10 : vector<8x32xf32> to vector<8x32xbf16>
    %12 = vector.extract_strided_slice %7 {offsets = [0, 0], sizes = [8, 4], strides = [1, 1]} : vector<8x32xbf16> to vector<8x4xbf16>
    %13 = vector.extract_strided_slice %9 {offsets = [0, 0], sizes = [8, 4], strides = [1, 1]} : vector<8x32xbf16> to vector<8x4xbf16>
    %14 = vector.extract_strided_slice %11 {offsets = [0, 0], sizes = [8, 4], strides = [1, 1]} : vector<8x32xbf16> to vector<8x4xbf16>
    %cst_5 = arith.constant dense<0.000000e+00> : vector<8x8xf32>
    %15 = tpu.matmul %12, %13, %cst_5 {dimension_numbers = #tpu.dot_dimension_numbers<[1], [1], [0], [0], [0, 0, 1, 0], [], []>} : vector<8x4xbf16>, vector<8x4xbf16>, vector<8x8xf32> -> vector<8x8xf32>
    %cst_6 = arith.constant dense<0xFF800000> : vector<8xf32>
    %16 = vector.multi_reduction <maximumf>, %15, %cst_6 [1] : vector<8x8xf32> to vector<8xf32>
    %17 = vector.shape_cast %16 : vector<8xf32> to vector<8x1xf32>
    %18 = vector.broadcast %17 : vector<8x1xf32> to vector<8x8xf32>
    %19 = arith.subf %15, %18 : vector<8x8xf32>
    %20 = math.exp %19 : vector<8x8xf32>
    %cst_7 = arith.constant dense<0.000000e+00> : vector<8xf32>
    %21 = vector.multi_reduction <add>, %20, %cst_7 [1] : vector<8x8xf32> to vector<8xf32>
    %22 = vector.shape_cast %21 : vector<8xf32> to vector<8x1xf32>
    %23 = tpu.reciprocal %22 {approx = true} : vector<8x1xf32> -> vector<8x1xf32>
    %24 = vector.broadcast %23 : vector<8x1xf32> to vector<8x8xf32>
    %25 = arith.mulf %20, %24 : vector<8x8xf32>
    %26 = arith.truncf %25 : vector<8x8xf32> to vector<8x8xbf16>
    %cst_8 = arith.constant dense<0.000000e+00> : vector<8x4xf32>
    %27 = tpu.matmul %26, %14, %cst_8 {dimension_numbers = #tpu.dot_dimension_numbers<[1], [0], [0], [1], [0, 0, 1, 1], [], []>} : vector<8x8xbf16>, vector<8x4xbf16>, vector<8x4xf32> -> vector<8x4xf32>
    %28 = vector.extract_strided_slice %7 {offsets = [0, 4], sizes = [8, 4], strides = [1, 1]} : vector<8x32xbf16> to vector<8x4xbf16>
    %29 = vector.extract_strided_slice %9 {offsets = [0, 4], sizes = [8, 4], strides = [1, 1]} : vector<8x32xbf16> to vector<8x4xbf16>
    %30 = vector.extract_strided_slice %11 {offsets = [0, 4], sizes = [8, 4], strides = [1, 1]} : vector<8x32xbf16> to vector<8x4xbf16>
    %cst_9 = arith.constant dense<0.000000e+00> : vector<8x8xf32>
    %31 = tpu.matmul %28, %29, %cst_9 {dimension_numbers = #tpu.dot_dimension_numbers<[1], [1], [0], [0], [0, 0, 1, 0], [], []>} : vector<8x4xbf16>, vector<8x4xbf16>, vector<8x8xf32> -> vector<8x8xf32>
    %cst_10 = arith.constant dense<0xFF800000> : vector<8xf32>
    %32 = vector.multi_reduction <maximumf>, %31, %cst_10 [1] : vector<8x8xf32> to vector<8xf32>
    %33 = vector.shape_cast %32 : vector<8xf32> to vector<8x1xf32>
    %34 = vector.broadcast %33 : vector<8x1xf32> to vector<8x8xf32>
    %35 = arith.subf %31, %34 : vector<8x8xf32>
    %36 = math.exp %35 : vector<8x8xf32>
    %cst_11 = arith.constant dense<0.000000e+00> : vector<8xf32>
    %37 = vector.multi_reduction <add>, %36, %cst_11 [1] : vector<8x8xf32> to vector<8xf32>
    %38 = vector.shape_cast %37 : vector<8xf32> to vector<8x1xf32>
    %39 = tpu.reciprocal %38 {approx = true} : vector<8x1xf32> -> vector<8x1xf32>
    %40 = vector.broadcast %39 : vector<8x1xf32> to vector<8x8xf32>
    %41 = arith.mulf %36, %40 : vector<8x8xf32>
    %42 = arith.truncf %41 : vector<8x8xf32> to vector<8x8xbf16>
    %cst_12 = arith.constant dense<0.000000e+00> : vector<8x4xf32>
    %43 = tpu.matmul %42, %30, %cst_12 {dimension_numbers = #tpu.dot_dimension_numbers<[1], [0], [0], [1], [0, 0, 1, 1], [], []>} : vector<8x8xbf16>, vector<8x4xbf16>, vector<8x4xf32> -> vector<8x4xf32>
    %44 = vector.extract_strided_slice %7 {offsets = [0, 8], sizes = [8, 4], strides = [1, 1]} : vector<8x32xbf16> to vector<8x4xbf16>
    %45 = vector.extract_strided_slice %9 {offsets = [0, 8], sizes = [8, 4], strides = [1, 1]} : vector<8x32xbf16> to vector<8x4xbf16>
    %46 = vector.extract_strided_slice %11 {offsets = [0, 8], sizes = [8, 4], strides = [1, 1]} : vector<8x32xbf16> to vector<8x4xbf16>
    %cst_13 = arith.constant dense<0.000000e+00> : vector<8x8xf32>
    %47 = tpu.matmul %44, %45, %cst_13 {dimension_numbers = #tpu.dot_dimension_numbers<[1], [1], [0], [0], [0, 0, 1, 0], [], []>} : vector<8x4xbf16>, vector<8x4xbf16>, vector<8x8xf32> -> vector<8x8xf32>
    %cst_14 = arith.constant dense<0xFF800000> : vector<8xf32>
    %48 = vector.multi_reduction <maximumf>, %47, %cst_14 [1] : vector<8x8xf32> to vector<8xf32>
    %49 = vector.shape_cast %48 : vector<8xf32> to vector<8x1xf32>
    %50 = vector.broadcast %49 : vector<8x1xf32> to vector<8x8xf32>
    %51 = arith.subf %47, %50 : vector<8x8xf32>
    %52 = math.exp %51 : vector<8x8xf32>
    %cst_15 = arith.constant dense<0.000000e+00> : vector<8xf32>
    %53 = vector.multi_reduction <add>, %52, %cst_15 [1] : vector<8x8xf32> to vector<8xf32>
    %54 = vector.shape_cast %53 : vector<8xf32> to vector<8x1xf32>
    %55 = tpu.reciprocal %54 {approx = true} : vector<8x1xf32> -> vector<8x1xf32>
    %56 = vector.broadcast %55 : vector<8x1xf32> to vector<8x8xf32>
    %57 = arith.mulf %52, %56 : vector<8x8xf32>
    %58 = arith.truncf %57 : vector<8x8xf32> to vector<8x8xbf16>
    %cst_16 = arith.constant dense<0.000000e+00> : vector<8x4xf32>
    %59 = tpu.matmul %58, %46, %cst_16 {dimension_numbers = #tpu.dot_dimension_numbers<[1], [0], [0], [1], [0, 0, 1, 1], [], []>} : vector<8x8xbf16>, vector<8x4xbf16>, vector<8x4xf32> -> vector<8x4xf32>
    %60 = vector.extract_strided_slice %7 {offsets = [0, 12], sizes = [8, 4], strides = [1, 1]} : vector<8x32xbf16> to vector<8x4xbf16>
    %61 = vector.extract_strided_slice %9 {offsets = [0, 12], sizes = [8, 4], strides = [1, 1]} : vector<8x32xbf16> to vector<8x4xbf16>
    %62 = vector.extract_strided_slice %11 {offsets = [0, 12], sizes = [8, 4], strides = [1, 1]} : vector<8x32xbf16> to vector<8x4xbf16>
    %cst_17 = arith.constant dense<0.000000e+00> : vector<8x8xf32>
    %63 = tpu.matmul %60, %61, %cst_17 {dimension_numbers = #tpu.dot_dimension_numbers<[1], [1], [0], [0], [0, 0, 1, 0], [], []>} : vector<8x4xbf16>, vector<8x4xbf16>, vector<8x8xf32> -> vector<8x8xf32>
    %cst_18 = arith.constant dense<0xFF800000> : vector<8xf32>
    %64 = vector.multi_reduction <maximumf>, %63, %cst_18 [1] : vector<8x8xf32> to vector<8xf32>
    %65 = vector.shape_cast %64 : vector<8xf32> to vector<8x1xf32>
    %66 = vector.broadcast %65 : vector<8x1xf32> to vector<8x8xf32>
    %67 = arith.subf %63, %66 : vector<8x8xf32>
    %68 = math.exp %67 : vector<8x8xf32>
    %cst_19 = arith.constant dense<0.000000e+00> : vector<8xf32>
    %69 = vector.multi_reduction <add>, %68, %cst_19 [1] : vector<8x8xf32> to vector<8xf32>
    %70 = vector.shape_cast %69 : vector<8xf32> to vector<8x1xf32>
    %71 = tpu.reciprocal %70 {approx = true} : vector<8x1xf32> -> vector<8x1xf32>
    %72 = vector.broadcast %71 : vector<8x1xf32> to vector<8x8xf32>
    %73 = arith.mulf %68, %72 : vector<8x8xf32>
    %74 = arith.truncf %73 : vector<8x8xf32> to vector<8x8xbf16>
    %cst_20 = arith.constant dense<0.000000e+00> : vector<8x4xf32>
    %75 = tpu.matmul %74, %62, %cst_20 {dimension_numbers = #tpu.dot_dimension_numbers<[1], [0], [0], [1], [0, 0, 1, 1], [], []>} : vector<8x8xbf16>, vector<8x4xbf16>, vector<8x4xf32> -> vector<8x4xf32>
    %76 = vector.extract_strided_slice %7 {offsets = [0, 16], sizes = [8, 4], strides = [1, 1]} : vector<8x32xbf16> to vector<8x4xbf16>
    %77 = vector.extract_strided_slice %9 {offsets = [0, 16], sizes = [8, 4], strides = [1, 1]} : vector<8x32xbf16> to vector<8x4xbf16>
    %78 = vector.extract_strided_slice %11 {offsets = [0, 16], sizes = [8, 4], strides = [1, 1]} : vector<8x32xbf16> to vector<8x4xbf16>
    %cst_21 = arith.constant dense<0.000000e+00> : vector<8x8xf32>
    %79 = tpu.matmul %76, %77, %cst_21 {dimension_numbers = #tpu.dot_dimension_numbers<[1], [1], [0], [0], [0, 0, 1, 0], [], []>} : vector<8x4xbf16>, vector<8x4xbf16>, vector<8x8xf32> -> vector<8x8xf32>
    %cst_22 = arith.constant dense<0xFF800000> : vector<8xf32>
    %80 = vector.multi_reduction <maximumf>, %79, %cst_22 [1] : vector<8x8xf32> to vector<8xf32>
    %81 = vector.shape_cast %80 : vector<8xf32> to vector<8x1xf32>
    %82 = vector.broadcast %81 : vector<8x1xf32> to vector<8x8xf32>
    %83 = arith.subf %79, %82 : vector<8x8xf32>
    %84 = math.exp %83 : vector<8x8xf32>
    %cst_23 = arith.constant dense<0.000000e+00> : vector<8xf32>
    %85 = vector.multi_reduction <add>, %84, %cst_23 [1] : vector<8x8xf32> to vector<8xf32>
    %86 = vector.shape_cast %85 : vector<8xf32> to vector<8x1xf32>
    %87 = tpu.reciprocal %86 {approx = true} : vector<8x1xf32> -> vector<8x1xf32>
    %88 = vector.broadcast %87 : vector<8x1xf32> to vector<8x8xf32>
    %89 = arith.mulf %84, %88 : vector<8x8xf32>
    %90 = arith.truncf %89 : vector<8x8xf32> to vector<8x8xbf16>
    %cst_24 = arith.constant dense<0.000000e+00> : vector<8x4xf32>
    %91 = tpu.matmul %90, %78, %cst_24 {dimension_numbers = #tpu.dot_dimension_numbers<[1], [0], [0], [1], [0, 0, 1, 1], [], []>} : vector<8x8xbf16>, vector<8x4xbf16>, vector<8x4xf32> -> vector<8x4xf32>
    %92 = vector.extract_strided_slice %7 {offsets = [0, 20], sizes = [8, 4], strides = [1, 1]} : vector<8x32xbf16> to vector<8x4xbf16>
    %93 = vector.extract_strided_slice %9 {offsets = [0, 20], sizes = [8, 4], strides = [1, 1]} : vector<8x32xbf16> to vector<8x4xbf16>
    %94 = vector.extract_strided_slice %11 {offsets = [0, 20], sizes = [8, 4], strides = [1, 1]} : vector<8x32xbf16> to vector<8x4xbf16>
    %cst_25 = arith.constant dense<0.000000e+00> : vector<8x8xf32>
    %95 = tpu.matmul %92, %93, %cst_25 {dimension_numbers = #tpu.dot_dimension_numbers<[1], [1], [0], [0], [0, 0, 1, 0], [], []>} : vector<8x4xbf16>, vector<8x4xbf16>, vector<8x8xf32> -> vector<8x8xf32>
    %cst_26 = arith.constant dense<0xFF800000> : vector<8xf32>
    %96 = vector.multi_reduction <maximumf>, %95, %cst_26 [1] : vector<8x8xf32> to vector<8xf32>
    %97 = vector.shape_cast %96 : vector<8xf32> to vector<8x1xf32>
    %98 = vector.broadcast %97 : vector<8x1xf32> to vector<8x8xf32>
    %99 = arith.subf %95, %98 : vector<8x8xf32>
    %100 = math.exp %99 : vector<8x8xf32>
    %cst_27 = arith.constant dense<0.000000e+00> : vector<8xf32>
    %101 = vector.multi_reduction <add>, %100, %cst_27 [1] : vector<8x8xf32> to vector<8xf32>
    %102 = vector.shape_cast %101 : vector<8xf32> to vector<8x1xf32>
    %103 = tpu.reciprocal %102 {approx = true} : vector<8x1xf32> -> vector<8x1xf32>
    %104 = vector.broadcast %103 : vector<8x1xf32> to vector<8x8xf32>
    %105 = arith.mulf %100, %104 : vector<8x8xf32>
    %106 = arith.truncf %105 : vector<8x8xf32> to vector<8x8xbf16>
    %cst_28 = arith.constant dense<0.000000e+00> : vector<8x4xf32>
    %107 = tpu.matmul %106, %94, %cst_28 {dimension_numbers = #tpu.dot_dimension_numbers<[1], [0], [0], [1], [0, 0, 1, 1], [], []>} : vector<8x8xbf16>, vector<8x4xbf16>, vector<8x4xf32> -> vector<8x4xf32>
    %108 = vector.extract_strided_slice %7 {offsets = [0, 24], sizes = [8, 4], strides = [1, 1]} : vector<8x32xbf16> to vector<8x4xbf16>
    %109 = vector.extract_strided_slice %9 {offsets = [0, 24], sizes = [8, 4], strides = [1, 1]} : vector<8x32xbf16> to vector<8x4xbf16>
    %110 = vector.extract_strided_slice %11 {offsets = [0, 24], sizes = [8, 4], strides = [1, 1]} : vector<8x32xbf16> to vector<8x4xbf16>
    %cst_29 = arith.constant dense<0.000000e+00> : vector<8x8xf32>
    %111 = tpu.matmul %108, %109, %cst_29 {dimension_numbers = #tpu.dot_dimension_numbers<[1], [1], [0], [0], [0, 0, 1, 0], [], []>} : vector<8x4xbf16>, vector<8x4xbf16>, vector<8x8xf32> -> vector<8x8xf32>
    %cst_30 = arith.constant dense<0xFF800000> : vector<8xf32>
    %112 = vector.multi_reduction <maximumf>, %111, %cst_30 [1] : vector<8x8xf32> to vector<8xf32>
    %113 = vector.shape_cast %112 : vector<8xf32> to vector<8x1xf32>
    %114 = vector.broadcast %113 : vector<8x1xf32> to vector<8x8xf32>
    %115 = arith.subf %111, %114 : vector<8x8xf32>
    %116 = math.exp %115 : vector<8x8xf32>
    %cst_31 = arith.constant dense<0.000000e+00> : vector<8xf32>
    %117 = vector.multi_reduction <add>, %116, %cst_31 [1] : vector<8x8xf32> to vector<8xf32>
    %118 = vector.shape_cast %117 : vector<8xf32> to vector<8x1xf32>
    %119 = tpu.reciprocal %118 {approx = true} : vector<8x1xf32> -> vector<8x1xf32>
    %120 = vector.broadcast %119 : vector<8x1xf32> to vector<8x8xf32>
    %121 = arith.mulf %116, %120 : vector<8x8xf32>
    %122 = arith.truncf %121 : vector<8x8xf32> to vector<8x8xbf16>
    %cst_32 = arith.constant dense<0.000000e+00> : vector<8x4xf32>
    %123 = tpu.matmul %122, %110, %cst_32 {dimension_numbers = #tpu.dot_dimension_numbers<[1], [0], [0], [1], [0, 0, 1, 1], [], []>} : vector<8x8xbf16>, vector<8x4xbf16>, vector<8x4xf32> -> vector<8x4xf32>
    %124 = vector.extract_strided_slice %7 {offsets = [0, 28], sizes = [8, 4], strides = [1, 1]} : vector<8x32xbf16> to vector<8x4xbf16>
    %125 = vector.extract_strided_slice %9 {offsets = [0, 28], sizes = [8, 4], strides = [1, 1]} : vector<8x32xbf16> to vector<8x4xbf16>
    %126 = vector.extract_strided_slice %11 {offsets = [0, 28], sizes = [8, 4], strides = [1, 1]} : vector<8x32xbf16> to vector<8x4xbf16>
    %cst_33 = arith.constant dense<0.000000e+00> : vector<8x8xf32>
    %127 = tpu.matmul %124, %125, %cst_33 {dimension_numbers = #tpu.dot_dimension_numbers<[1], [1], [0], [0], [0, 0, 1, 0], [], []>} : vector<8x4xbf16>, vector<8x4xbf16>, vector<8x8xf32> -> vector<8x8xf32>
    %cst_34 = arith.constant dense<0xFF800000> : vector<8xf32>
    %128 = vector.multi_reduction <maximumf>, %127, %cst_34 [1] : vector<8x8xf32> to vector<8xf32>
    %129 = vector.shape_cast %128 : vector<8xf32> to vector<8x1xf32>
    %130 = vector.broadcast %129 : vector<8x1xf32> to vector<8x8xf32>
    %131 = arith.subf %127, %130 : vector<8x8xf32>
    %132 = math.exp %131 : vector<8x8xf32>
    %cst_35 = arith.constant dense<0.000000e+00> : vector<8xf32>
    %133 = vector.multi_reduction <add>, %132, %cst_35 [1] : vector<8x8xf32> to vector<8xf32>
    %134 = vector.shape_cast %133 : vector<8xf32> to vector<8x1xf32>
    %135 = tpu.reciprocal %134 {approx = true} : vector<8x1xf32> -> vector<8x1xf32>
    %136 = vector.broadcast %135 : vector<8x1xf32> to vector<8x8xf32>
    %137 = arith.mulf %132, %136 : vector<8x8xf32>
    %138 = arith.truncf %137 : vector<8x8xf32> to vector<8x8xbf16>
    %cst_36 = arith.constant dense<0.000000e+00> : vector<8x4xf32>
    %139 = tpu.matmul %138, %126, %cst_36 {dimension_numbers = #tpu.dot_dimension_numbers<[1], [0], [0], [1], [0, 0, 1, 1], [], []>} : vector<8x8xbf16>, vector<8x4xbf16>, vector<8x4xf32> -> vector<8x4xf32>
    %140 = tpu.concatenate %27, %43, %59, %75, %91, %107, %123, %139 in 1 : vector<8x4xf32>, vector<8x4xf32>, vector<8x4xf32>, vector<8x4xf32>, vector<8x4xf32>, vector<8x4xf32>, vector<8x4xf32>, vector<8x4xf32> -> vector<8x32xf32>
    %141 = arith.truncf %140 : vector<8x32xf32> to vector<8x32xbf16>
    %c0_37 = arith.constant 0 : index
    %c0_38 = arith.constant 0 : index
    %142 = vector.load %arg3[%c0_37, %c0_38] : memref<32x32xbf16, #tpu.memory_space<vmem>>, vector<32x32xbf16>
    %cst_39 = arith.constant dense<0.000000e+00> : vector<8x32xf32>
    %143 = tpu.matmul %141, %142, %cst_39 {dimension_numbers = #tpu.dot_dimension_numbers<[1], [1], [0], [0], [0, 0, 1, 0], [], []>} : vector<8x32xbf16>, vector<32x32xbf16>, vector<8x32xf32> -> vector<8x32xf32>
    %c0_40 = arith.constant 0 : index
    %c0_41 = arith.constant 0 : index
    %c0_42 = arith.constant 0 : index
    %144 = vector.load %arg4[%c0_40, %c0_41, %c0_42] : memref<1x8x32xf32, #tpu.memory_space<vmem>>, vector<1x8x32xf32>
    %145 = vector.shape_cast %144 : vector<1x8x32xf32> to vector<8x32xf32>
    %146 = vector.shape_cast %143 : vector<8x32xf32> to vector<1x8x32xf32>
    tpu.vector_store %arg4[%c0_40, %c0_41, %c0_42], %146 {strides = array<i32>} : memref<1x8x32xf32, #tpu.memory_space<vmem>>, vector<1x8x32xf32>,
    return
  }
  func.func @transform_0(%arg0: i32) -> (i32, i32, i32) {
    %c0_i32 = arith.constant 0 : i32
    %c0_i32_0 = arith.constant 0 : i32
    %c0_i32_1 = arith.constant 0 : i32
    return %arg0, %c0_i32, %c0_i32_0 : i32, i32, i32
  }
  func.func @transform_1(%arg0: i32) -> (i32, i32) {
    %c0_i32 = arith.constant 0 : i32
    %c0_i32_0 = arith.constant 0 : i32
    %c0_i32_1 = arith.constant 0 : i32
    return %c0_i32, %c0_i32_0 : i32, i32
  }
  func.func @transform_2(%arg0: i32) -> (i32, i32) {
    %c0_i32 = arith.constant 0 : i32
    %c0_i32_0 = arith.constant 0 : i32
    %c0_i32_1 = arith.constant 0 : i32
    return %c0_i32, %c0_i32_0 : i32, i32
  }
  func.func @transform_3(%arg0: i32) -> (i32, i32, i32) {
    %c0_i32 = arith.constant 0 : i32
    %c0_i32_0 = arith.constant 0 : i32
    %c0_i32_1 = arith.constant 0 : i32
    return %arg0, %c0_i32, %c0_i32_0 : i32, i32, i32
  }
}

</mosaic_0001>

<llo_original>
// kernel: tpu_custom_call.1
$region0: #{tpu_custom_call.1}
  #allocation0 [shape = 'u32[]', space=smem, size = 0x4, offset = 0x4, fixed_abs, tag = 'smem constant byte address 0x4 - core index']
  #allocation1 [shape = 'u32[144,128]{1,0:T(1,128)}', space=vmem, size = 0x12000, scoped, tag = 'internal scratch']
  %s0 = inlined_call_operand.vmem [shape: bf16[2,8,32], index: 0, kind: input, shape index: {}]
  %s1 = inlined_call_operand.vmem [shape: bf16[96,32], index: 1, kind: input, shape index: {}]
  %s2 = inlined_call_operand.vmem [shape: bf16[32,32], index: 2, kind: input, shape index: {}]
  %s3 = inlined_call_operand.hbm [shape: f32[2,8,32], index: 3, kind: output, shape index: {}]
  %s4 = sld [smem:[#allocation0]]
  $region45: #{tpu_custom_call.1} parent=0
    _
  %s6 = ssub.s32 1, %s4
  %s7 = scalar_select 0, %s6, %s4
  $region1: #{tpu_custom_call.1} parent=0
    #allocation2 [shape = 'u8[8192]{0}', space=vmem, size = 0x2000, scoped, tag = 'output window, operand 0']
    #allocation3 [shape = 's32[2]{0}', space=sflag, size = 0x8, scoped, tag = 'scoped memory for tpu_custom_call.1']
    %8 = vsyncpa [#allocation3], 0
    %s9 = scalar_lea.sflag [#allocation3], 1
    %10 = vsyncpa %s9, 0
    loop: start=0, step=1, limit=4
    $region2: #{tpu_custom_call.1} parent=1 // loop_pre_header
      _
    $region3: #{tpu_custom_call.1} parent=1 // loop_header
      %s12 = sphi 0, %s16
      %p13 = scmp.ge.s32.totalorder %s12, 4
      %s22 = sphi 0, %s24
      %s25 = sphi 0, %s22
      %s26 = sphi 0, %s25
      %s42 = sphi 0, %s26
      %s46 = sphi 0, %s46
      %s48 = sphi 0, %s46
      %s49 = sphi 0, %s48
      %s63 = sphi 0, %s49
      %s67 = sphi 0, %s67
      %s69 = sphi 0, %s67
      %s70 = sphi 0, %s69
      %s84 = sphi 0, %s70
      %s90 = sphi 0, %s92
      %s93 = sphi 0, %s90
      %s94 = sphi 0, %s93
      %s110 = sphi 0, %s94
    $region4: #{tpu_custom_call.1} parent=1 // loop_header_branch
      %15 = sbr.rel (%p13) target = $region8
    $region5: #{tpu_custom_call.1} parent=1 // loop_body
      %s17 = ssub.s32 %s12, 1
      %s18 = ssub.s32 %s12, 2
      %s19 = sadd.s32 %s12, 1
      %s20 = ssub.s32 %s12, %s19
      %p21 = scmp.eq.s32.totalorder %s20, 0
      %s23 = sadd.s32 %s22, 1
      %s24 = scalar_select %p21, %s22, %s23
      %p27 = pneg %p21
      %p28 = scmp.eq.s32.totalorder %s12, 1
      %p29 = por %p27, %p28
      %p30 = scmp.ne.s32.totalorder %s22, %s25
      %p31 = scmp.eq.s32.totalorder %s12, 0
      %p32 = por %p30, %p31
      %p33 = scmp.ne.s32.totalorder %s22, %s25
      %p34 = scmp.eq.s32.totalorder %s17, 1
      %p35 = por %p33, %p34
      %p36 = scmp.ne.s32.totalorder %s25, %s26
      %p37 = scmp.eq.s32.totalorder %s17, 0
      %p38 = por %p36, %p37
      %p39 = scmp.ne.s32.totalorder %s25, %s26
      %p40 = scmp.eq.s32.totalorder %s18, 1
      %p41 = por %p39, %p40
      %p43 = scmp.ne.s32.totalorder %s26, %s42
      %p44 = scmp.eq.s32.totalorder %s18, 0
      %p45 = por %p43, %p44
      %s47 = sadd.s32 %s46, 1
      %p50 = scmp.eq.s32.totalorder %s12, 1
      %p51 = scmp.ne.s32.totalorder %s46, %s48
      %p52 = scmp.eq.s32.totalorder %s12, 0
      %p53 = por %p51, %p52
      %p54 = scmp.ne.s32.totalorder %s46, %s48
      %p55 = scmp.eq.s32.totalorder %s17, 1
      %p56 = por %p54, %p55
      %p57 = scmp.ne.s32.totalorder %s48, %s49
      %p58 = scmp.eq.s32.totalorder %s17, 0
      %p59 = por %p57, %p58
      %p60 = scmp.ne.s32.totalorder %s48, %s49
      %p61 = scmp.eq.s32.totalorder %s18, 1
      %p62 = por %p60, %p61
      %p64 = scmp.ne.s32.totalorder %s49, %s63
      %p65 = scmp.eq.s32.totalorder %s18, 0
      %p66 = por %p64, %p65
      %s68 = sadd.s32 %s67, 1
      %p71 = scmp.eq.s32.totalorder %s12, 1
      %p72 = scmp.ne.s32.totalorder %s67, %s69
      %p73 = scmp.eq.s32.totalorder %s12, 0
      %p74 = por %p72, %p73
      %p75 = scmp.ne.s32.totalorder %s67, %s69
      %p76 = scmp.eq.s32.totalorder %s17, 1
      %p77 = por %p75, %p76
      %p78 = scmp.ne.s32.totalorder %s69, %s70
      %p79 = scmp.eq.s32.totalorder %s17, 0
      %p80 = por %p78, %p79
      %p81 = scmp.ne.s32.totalorder %s69, %s70
      %p82 = scmp.eq.s32.totalorder %s18, 1
      %p83 = por %p81, %p82
      %p85 = scmp.ne.s32.totalorder %s70, %s84
      %p86 = scmp.eq.s32.totalorder %s18, 0
      %p87 = por %p85, %p86
      %s88 = ssub.s32 %s12, %s19
      %p89 = scmp.eq.s32.totalorder %s88, 0
      %s91 = sadd.s32 %s90, 1
      %s92 = scalar_select %p89, %s90, %s91
      %p95 = pneg %p89
      %p96 = scmp.eq.s32.totalorder %s12, 1
      %p97 = por %p95, %p96
      %p98 = scmp.ne.s32.totalorder %s90, %s93
      %p99 = scmp.eq.s32.totalorder %s12, 0
      %p100 = por %p98, %p99
      %p101 = scmp.ne.s32.totalorder %s90, %s93
      %p102 = scmp.eq.s32.totalorder %s17, 1
      %p103 = por %p101, %p102
      %p104 = scmp.ne.s32.totalorder %s93, %s94
      %p105 = scmp.eq.s32.totalorder %s17, 0
      %p106 = por %p104, %p105
      %p107 = scmp.ne.s32.totalorder %s93, %s94
      %p108 = scmp.eq.s32.totalorder %s18, 1
      %p109 = por %p107, %p108
      %p111 = scmp.ne.s32.totalorder %s94, %s110
      %p112 = scmp.eq.s32.totalorder %s18, 0
      %p113 = por %p111, %p112
      %p114 = scmp.le.s32.totalorder 1, %s12
      %p115 = scmp.lt.s32.totalorder %s12, 3
      %p116 = pnand %p114, %p115
      %p117 = pneg %p116
      // Predicated region
      $region9: #{tpu_custom_call.1} parent=5 // pred_check
        _
      $region10: #{tpu_custom_call.1} parent=5 // pred_check_branch
        %119 = sbr.rel (%p116) target = $region12
      $region11: #{tpu_custom_call.1} parent=5 // pred_region
        %s120 = ssub.s32 %s12, 1
        // Predicated region
        $region13: #{tpu_custom_call.1} parent=11 // pred_check
          %p121 = pneg %p59
        $region14: #{tpu_custom_call.1} parent=11 // pred_check_branch
          %123 = sbr.rel (%p121) target = $region16
        $region15: #{tpu_custom_call.1} parent=11 // pred_region
          _
        $region16: #{tpu_custom_call.1} parent=11 // pred_fallthru
          _
        // Predicated region
        $region17: #{tpu_custom_call.1} parent=11 // pred_check
          %p124 = pneg %p80
        $region18: #{tpu_custom_call.1} parent=11 // pred_check_branch
          %126 = sbr.rel (%p124) target = $region20
        $region19: #{tpu_custom_call.1} parent=11 // pred_region
          _
        $region20: #{tpu_custom_call.1} parent=11 // pred_fallthru
          _
      $region12: #{tpu_custom_call.1} parent=5 // pred_fallthru
        _
      %p127 = scmp.lt.s32.totalorder %s12, 2
      // Predicated region
      $region21: #{tpu_custom_call.1} parent=5 // pred_check
        %p128 = pneg %p127
      $region22: #{tpu_custom_call.1} parent=5 // pred_check_branch
        %130 = sbr.rel (%p128) target = $region24
      $region23: #{tpu_custom_call.1} parent=5 // pred_region
        // Predicated region
        $region25: #{tpu_custom_call.1} parent=23 // pred_check
          %p131 = pneg %p32
        $region26: #{tpu_custom_call.1} parent=23 // pred_check_branch
          %133 = sbr.rel (%p131) target = $region28
        $region27: #{tpu_custom_call.1} parent=23 // pred_region
          %p134 = scmp.lt.s32.totalorder %s12, 1
          %s135 = scalar_select %p134, %s12, 1
          %s136 = smul.addr %s135, 4
          %s137 = scalar_lea.vmem %s0, %s136
        $region28: #{tpu_custom_call.1} parent=23 // pred_fallthru
          _
      $region24: #{tpu_custom_call.1} parent=5 // pred_fallthru
        _
      %p138 = scmp.le.s32.totalorder 1, %s12
      %p139 = scmp.lt.s32.totalorder %s12, 3
      %p140 = pnand %p138, %p139
      %p141 = pneg %p140
      // Predicated region
      $region29: #{tpu_custom_call.1} parent=5 // pred_check
        _
      $region30: #{tpu_custom_call.1} parent=5 // pred_check_branch
        %143 = sbr.rel (%p140) target = $region32
      $region31: #{tpu_custom_call.1} parent=5 // pred_region
        %s144 = ssub.s32 %s12, 1
        %p145 = scmp.lt.s32.totalorder %s17, 1
        %s146 = scalar_select %p145, %s17, 1
        %s147 = smul.addr %s146, 4
        %s148 = scalar_lea.vmem %s0, %s147
        %p149 = pneg %p38
        %p150 = pneg %p35
        %p151 = pneg %p59
        %p152 = pneg %p56
        %p153 = pneg %p80
        %p154 = pneg %p77
        %p155 = pneg %p106
        %p156 = pneg %p103
        %s157 = sand.u32 %s93, 1
        %s158 = scalar_lea.sflag [#allocation3], %s157
        %s159 = sand.u32 %s93, 1
        %s160 = smul.addr %s159, 8
        %s161 = scalar_lea.vmem [#allocation2], %s160
        %p162 = scmp.lt.s32.totalorder %s17, 1
        %s163 = scalar_select %p162, %s17, 1
        %s164 = smul.addr %s163, 4
        %s165 = scalar_lea.vmem %s0, %s164
        %v167 = vld [vmem:[%s165] sm:$0xf]
        %v168 = vld [vmem:[%s1] sm:$0xf]
        %v169 = vld [vmem:[%s1 + $0x4] sm:$0xf]
        %v170 = vld [vmem:[%s1 + $0x8] sm:$0xf]
        %v171 = vld [vmem:[%s1 + $0xc] sm:$0xf]
        %v172 = vld [vmem:[%s1 + $0x10] sm:$0xf]
        %v173 = vld [vmem:[%s1 + $0x14] sm:$0xf]
        %v174 = vld [vmem:[%s1 + $0x18] sm:$0xf]
        %v175 = vld [vmem:[%s1 + $0x1c] sm:$0xf]
        %v176 = vld [vmem:[%s1 + $0x20] sm:$0xf]
        %v177 = vld [vmem:[%s1 + $0x24] sm:$0xf]
        %v178 = vld [vmem:[%s1 + $0x28] sm:$0xf]
        %v179 = vld [vmem:[%s1 + $0x2c] sm:$0xf]
        %v192 = vunpack.c.l.b16 %v168
        %v193 = vunpack.c.l.b16 %v169
        %v194 = vunpack.c.l.b16 %v170
        %v195 = vunpack.c.l.b16 %v171
        %v196 = vunpack.c.l.b16 %v172
        %v197 = vunpack.c.l.b16 %v173
        %v198 = vunpack.c.l.b16 %v174
        %v199 = vunpack.c.l.b16 %v175
        %v200 = vunpack.c.l.b16 %v176
        %v201 = vunpack.c.l.b16 %v177
        %v202 = vunpack.c.l.b16 %v178
        %v203 = vunpack.c.l.b16 %v179
        %v204 = vpack.c.b16 %v193, %v192
        %v205 = vpack.c.b16 %v195, %v194
        %v206 = vpack.c.b16 %v197, %v196
        %v207 = vpack.c.b16 %v199, %v198
        %v208 = vpack.c.b16 %v201, %v200
        %v209 = vpack.c.b16 %v203, %v202
        %vm210 = vcmask 261120
        %v212 = vsel %vm210, %v167, 0
        %v215 = vsel %vm210, %v204, 0
        %v218 = vsel %vm210, %v205, 0
        %v221 = vsel %vm210, %v206, 0
        %v224 = vsel %vm210, %v207, 0
        %v227 = vsel %vm210, %v208, 0
        %v230 = vsel %vm210, %v209, 0
        %232 = vmatprep.subr.bf16.mxu0 0
        %233 = vmatpush1.bf16.xpose.msra.mxu0 %v215
        %234 = vmatprep.subr.bf16.mxu0 0
        %235 = vmatpush1.bf16.xpose.msra.mxu0 %v218
        %236 = vmatprep.subr.bf16.mxu0 0
        %237 = vmatpush1.bf16.xpose.msra.mxu0 %v221
        %238 = vmatprep.subr.bf16.mxu0 0
        %239 = vmatpush1.bf16.xpose.msra.mxu0 %v224
        %240 = vmatprep.subr.bf16.mxu0 0
        %241 = vmatpush1.bf16.xpose.msra.mxu0 %v227
        %242 = vmatprep.subr.bf16.mxu0 0
        %243 = vmatpush1.bf16.xpose.msra.mxu0 %v230
        %244 = vmatprep.subr.bf16.mxu0 0
        %245 = vmatpush1.bf16.xpose.msra.mxu0 0
        %246 = vmatprep.subr.bf16.mxu0 0
        %247 = vmatpush1.bf16.xpose.msra.mxu0 0
        %248 = vmatprep.subr.bf16.mxu0 0
        %249 = vmatpush1.bf16.xpose.msra.mxu0 0
        %250 = vmatprep.subr.bf16.mxu0 0
        %251 = vmatpush1.bf16.xpose.msra.mxu0 0
        %252 = vmatprep.subr.bf16.mxu0 0
        %253 = vmatpush1.bf16.xpose.msra.mxu0 0
        %254 = vmatprep.subr.bf16.mxu0 0
        %255 = vmatpush1.bf16.xpose.msra.mxu0 0
        %256 = vmatprep.subr.bf16.mxu0 0
        %257 = vmatpush1.bf16.xpose.msra.mxu0 0
        %258 = vmatprep.subr.bf16.mxu0 0
        %259 = vmatpush1.bf16.xpose.msra.mxu0 0
        %260 = vmatprep.subr.bf16.mxu0 0
        %261 = vmatpush1.bf16.xpose.msra.mxu0 0
        %262 = vmatprep.subr.bf16.mxu0 0
        %263 = vmatpush1.bf16.xpose.msra.mxu0 0
        %264 = vmatprep.mubr.bf16.mxu0 0
        %265 = vmatmul.mubr.bf16.gmra.mrb[0].mxu0 %v212
        %v266 = vpop.f32.mrb[0].mxu0
        %v267 = vadd.f32 0.0, %v266
        %v268 = vpop.f32.mrb[0].mxu0
        %v269 = vpop.f32.mrb[0].mxu0
        %v270 = vpop.f32.mrb[0].mxu0
        %271 = vdwg.mxu0
        %v272 = vmul.f32 %v267, 0.5
        %v273 = vpack.c.bf16 %v272, %v272
        %v274 = vpack.c.bf16 %v267, %v267
        %276 = vrot.lane.b32.xlu0 %v274, 96
        %v277 = vpop.permute.xlu0 %276
        %vm278 = vcmask 31744
        %v280 = vsel %vm278, %v273, 0
        %v283 = vsel %vm278, %v277, 0
        %285 = vmatprep.subr.bf16.mxu0 0
        %286 = vmatpush1.bf16.xpose.msra.mxu0 %v283
        %287 = vmatprep.subr.bf16.mxu0 0
        %288 = vmatpush1.bf16.xpose.msra.mxu0 0
        %289 = vmatprep.subr.bf16.mxu0 0
        %290 = vmatpush1.bf16.xpose.msra.mxu0 0
        %291 = vmatprep.subr.bf16.mxu0 0
        %292 = vmatpush1.bf16.xpose.msra.mxu0 0
        %293 = vmatprep.subr.bf16.mxu0 0
        %294 = vmatpush1.bf16.xpose.msra.mxu0 0
        %295 = vmatprep.subr.bf16.mxu0 0
        %296 = vmatpush1.bf16.xpose.msra.mxu0 0
        %297 = vmatprep.subr.bf16.mxu0 0
        %298 = vmatpush1.bf16.xpose.msra.mxu0 0
        %299 = vmatprep.subr.bf16.mxu0 0
        %300 = vmatpush1.bf16.xpose.msra.mxu0 0
        %301 = vmatprep.subr.bf16.mxu0 0
        %302 = vmatpush1.bf16.xpose.msra.mxu0 0
        %303 = vmatprep.subr.bf16.mxu0 0
        %304 = vmatpush1.bf16.xpose.msra.mxu0 0
        %305 = vmatprep.subr.bf16.mxu0 0
        %306 = vmatpush1.bf16.xpose.msra.mxu0 0
        %307 = vmatprep.subr.bf16.mxu0 0
        %308 = vmatpush1.bf16.xpose.msra.mxu0 0
        %309 = vmatprep.subr.bf16.mxu0 0
        %310 = vmatpush1.bf16.xpose.msra.mxu0 0
        %311 = vmatprep.subr.bf16.mxu0 0
        %312 = vmatpush1.bf16.xpose.msra.mxu0 0
        %313 = vmatprep.subr.bf16.mxu0 0
        %314 = vmatpush1.bf16.xpose.msra.mxu0 0
        %315 = vmatprep.subr.bf16.mxu0 0
        %316 = vmatpush1.bf16.xpose.msra.mxu0 0
        %317 = vmatprep.mubr.bf16.mxu0 0
        %318 = vmatmul.mubr.bf16.gmra.mrb[0].mxu0 %v280
        %v319 = vpop.f32.mrb[0].mxu0
        %v320 = vadd.f32 0.0, %v319
        %v321 = vpop.f32.mrb[0].mxu0
        %v322 = vpop.f32.mrb[0].mxu0
        %v323 = vpop.f32.mrb[0].mxu0
        %324 = vdwg.mxu0
        %vm325 = vcmask 64512
        %v326 = vsel %vm325, %v320, -inf
        %327 = vmax.xlane.f32.xlu0 %v326
        %v328 = vpop.xlane.xlu0 %327
        %v329 = vsub.f32 %v320, %v328
        %v330 = vmul.f32 %v329, 1.442695
        %v331 = vpow.pop %v330
        %v332 = vsel %vm325, %v331, 0.0
        %333 = vadd.xlane.f32.xlu0 %v332
        %v334 = vpop.xlane.xlu0 %333
        %v335 = vrcp.pop %v334
        %v336 = vmul.f32 %v331, %v335
        %v337 = vpack.c.bf16 %v336, %v336
        %338 = vrot.lane.b32.xlu0 %v274, 64
        %v339 = vpop.permute.xlu0 %338
        %v341 = vsel %vm325, %v337, 0
        %vm343 = vcmask 1043456
        %v345 = vsel %vm343, %v339, 0
        %347 = vmatprep.subr.bf16.mxu0 0
        %348 = vmatpush1.bf16.msra.mxu0 %v345
        %349 = vmatprep.subr.bf16.mxu0 0
        %350 = vmatpush1.bf16.msra.mxu0 0
        %351 = vmatprep.subr.bf16.mxu0 0
        %352 = vmatpush1.bf16.msra.mxu0 0
        %353 = vmatprep.subr.bf16.mxu0 0
        %354 = vmatpush1.bf16.msra.mxu0 0
        %355 = vmatprep.subr.bf16.mxu0 0
        %356 = vmatpush1.bf16.msra.mxu0 0
        %357 = vmatprep.subr.bf16.mxu0 0
        %358 = vmatpush1.bf16.msra.mxu0 0
        %359 = vmatprep.subr.bf16.mxu0 0
        %360 = vmatpush1.bf16.msra.mxu0 0
        %361 = vmatprep.subr.bf16.mxu0 0
        %362 = vmatpush1.bf16.msra.mxu0 0
        %363 = vmatprep.subr.bf16.mxu0 0
        %364 = vmatpush1.bf16.msra.mxu0 0
        %365 = vmatprep.subr.bf16.mxu0 0
        %366 = vmatpush1.bf16.msra.mxu0 0
        %367 = vmatprep.subr.bf16.mxu0 0
        %368 = vmatpush1.bf16.msra.mxu0 0
        %369 = vmatprep.subr.bf16.mxu0 0
        %370 = vmatpush1.bf16.msra.mxu0 0
        %371 = vmatprep.subr.bf16.mxu0 0
        %372 = vmatpush1.bf16.msra.mxu0 0
        %373 = vmatprep.subr.bf16.mxu0 0
        %374 = vmatpush1.bf16.msra.mxu0 0
        %375 = vmatprep.subr.bf16.mxu0 0
        %376 = vmatpush1.bf16.msra.mxu0 0
        %377 = vmatprep.subr.bf16.mxu0 0
        %378 = vmatpush1.bf16.msra.mxu0 0
        %379 = vmatprep.mubr.bf16.mxu0 0
        %380 = vmatmul.mubr.bf16.gmra.mrb[0].mxu0 %v341
        %v381 = vpop.f32.mrb[0].mxu0
        %v382 = vadd.f32 0.0, %v381
        %v383 = vpop.f32.mrb[0].mxu0
        %v384 = vpop.f32.mrb[0].mxu0
        %v385 = vpop.f32.mrb[0].mxu0
        %386 = vdwg.mxu0
        %388 = vrot.lane.b32.xlu0 %v273, 124
        %v389 = vpop.permute.xlu0 %388
        %390 = vrot.lane.b32.xlu0 %v274, 92
        %v391 = vpop.permute.xlu0 %390
        %v393 = vsel %vm278, %v389, 0
        %v396 = vsel %vm278, %v391, 0
        %398 = vmatprep.subr.bf16.mxu0 0
        %399 = vmatpush1.bf16.xpose.msra.mxu0 %v396
        %400 = vmatprep.subr.bf16.mxu0 0
        %401 = vmatpush1.bf16.xpose.msra.mxu0 0
        %402 = vmatprep.subr.bf16.mxu0 0
        %403 = vmatpush1.bf16.xpose.msra.mxu0 0
        %404 = vmatprep.subr.bf16.mxu0 0
        %405 = vmatpush1.bf16.xpose.msra.mxu0 0
        %406 = vmatprep.subr.bf16.mxu0 0
        %407 = vmatpush1.bf16.xpose.msra.mxu0 0
        %408 = vmatprep.subr.bf16.mxu0 0
        %409 = vmatpush1.bf16.xpose.msra.mxu0 0
        %410 = vmatprep.subr.bf16.mxu0 0
        %411 = vmatpush1.bf16.xpose.msra.mxu0 0
        %412 = vmatprep.subr.bf16.mxu0 0
        %413 = vmatpush1.bf16.xpose.msra.mxu0 0
        %414 = vmatprep.subr.bf16.mxu0 0
        %415 = vmatpush1.bf16.xpose.msra.mxu0 0
        %416 = vmatprep.subr.bf16.mxu0 0
        %417 = vmatpush1.bf16.xpose.msra.mxu0 0
        %418 = vmatprep.subr.bf16.mxu0 0
        %419 = vmatpush1.bf16.xpose.msra.mxu0 0
        %420 = vmatprep.subr.bf16.mxu0 0
        %421 = vmatpush1.bf16.xpose.msra.mxu0 0
        %422 = vmatprep.subr.bf16.mxu0 0
        %423 = vmatpush1.bf16.xpose.msra.mxu0 0
        %424 = vmatprep.subr.bf16.mxu0 0
        %425 = vmatpush1.bf16.xpose.msra.mxu0 0
        %426 = vmatprep.subr.bf16.mxu0 0
        %427 = vmatpush1.bf16.xpose.msra.mxu0 0
        %428 = vmatprep.subr.bf16.mxu0 0
        %429 = vmatpush1.bf16.xpose.msra.mxu0 0
        %430 = vmatprep.mubr.bf16.mxu0 0
        %431 = vmatmul.mubr.bf16.gmra.mrb[0].mxu0 %v393
        %v432 = vpop.f32.mrb[0].mxu0
        %v433 = vadd.f32 0.0, %v432
        %v434 = vpop.f32.mrb[0].mxu0
        %v435 = vpop.f32.mrb[0].mxu0
        %v436 = vpop.f32.mrb[0].mxu0
        %437 = vdwg.mxu0
        %v438 = vsel %vm325, %v433, -inf
        %439 = vmax.xlane.f32.xlu0 %v438
        %v440 = vpop.xlane.xlu0 %439
        %v441 = vsub.f32 %v433, %v440
        %v442 = vmul.f32 %v441, 1.442695
        %v443 = vpow.pop %v442
        %v444 = vsel %vm325, %v443, 0.0
        %445 = vadd.xlane.f32.xlu0 %v444
        %v446 = vpop.xlane.xlu0 %445
        %v447 = vrcp.pop %v446
        %v448 = vmul.f32 %v443, %v447
        %v449 = vpack.c.bf16 %v448, %v448
        %450 = vrot.lane.b32.xlu0 %v274, 60
        %v451 = vpop.permute.xlu0 %450
        %v453 = vsel %vm325, %v449, 0
        %v456 = vsel %vm343, %v451, 0
        %458 = vmatprep.subr.bf16.mxu0 0
        %459 = vmatpush1.bf16.msra.mxu0 %v456
        %460 = vmatprep.subr.bf16.mxu0 0
        %461 = vmatpush1.bf16.msra.mxu0 0
        %462 = vmatprep.subr.bf16.mxu0 0
        %463 = vmatpush1.bf16.msra.mxu0 0
        %464 = vmatprep.subr.bf16.mxu0 0
        %465 = vmatpush1.bf16.msra.mxu0 0
        %466 = vmatprep.subr.bf16.mxu0 0
        %467 = vmatpush1.bf16.msra.mxu0 0
        %468 = vmatprep.subr.bf16.mxu0 0
        %469 = vmatpush1.bf16.msra.mxu0 0
        %470 = vmatprep.subr.bf16.mxu0 0
        %471 = vmatpush1.bf16.msra.mxu0 0
        %472 = vmatprep.subr.bf16.mxu0 0
        %473 = vmatpush1.bf16.msra.mxu0 0
        %474 = vmatprep.subr.bf16.mxu0 0
        %475 = vmatpush1.bf16.msra.mxu0 0
        %476 = vmatprep.subr.bf16.mxu0 0
        %477 = vmatpush1.bf16.msra.mxu0 0
        %478 = vmatprep.subr.bf16.mxu0 0
        %479 = vmatpush1.bf16.msra.mxu0 0
        %480 = vmatprep.subr.bf16.mxu0 0
        %481 = vmatpush1.bf16.msra.mxu0 0
        %482 = vmatprep.subr.bf16.mxu0 0
        %483 = vmatpush1.bf16.msra.mxu0 0
        %484 = vmatprep.subr.bf16.mxu0 0
        %485 = vmatpush1.bf16.msra.mxu0 0
        %486 = vmatprep.subr.bf16.mxu0 0
        %487 = vmatpush1.bf16.msra.mxu0 0
        %488 = vmatprep.subr.bf16.mxu0 0
        %489 = vmatpush1.bf16.msra.mxu0 0
        %490 = vmatprep.mubr.bf16.mxu0 0
        %491 = vmatmul.mubr.bf16.gmra.mrb[0].mxu0 %v453
        %v492 = vpop.f32.mrb[0].mxu0
        %v493 = vadd.f32 0.0, %v492
        %v494 = vpop.f32.mrb[0].mxu0
        %v495 = vpop.f32.mrb[0].mxu0
        %v496 = vpop.f32.mrb[0].mxu0
        %497 = vdwg.mxu0
        %498 = vrot.lane.b32.xlu0 %v273, 120
        %v499 = vpop.permute.xlu0 %498
        %500 = vrot.lane.b32.xlu0 %v274, 88
        %v501 = vpop.permute.xlu0 %500
        %v503 = vsel %vm278, %v499, 0
        %v506 = vsel %vm278, %v501, 0
        %508 = vmatprep.subr.bf16.mxu0 0
        %509 = vmatpush1.bf16.xpose.msra.mxu0 %v506
        %510 = vmatprep.subr.bf16.mxu0 0
        %511 = vmatpush1.bf16.xpose.msra.mxu0 0
        %512 = vmatprep.subr.bf16.mxu0 0
        %513 = vmatpush1.bf16.xpose.msra.mxu0 0
        %514 = vmatprep.subr.bf16.mxu0 0
        %515 = vmatpush1.bf16.xpose.msra.mxu0 0
        %516 = vmatprep.subr.bf16.mxu0 0
        %517 = vmatpush1.bf16.xpose.msra.mxu0 0
        %518 = vmatprep.subr.bf16.mxu0 0
        %519 = vmatpush1.bf16.xpose.msra.mxu0 0
        %520 = vmatprep.subr.bf16.mxu0 0
        %521 = vmatpush1.bf16.xpose.msra.mxu0 0
        %522 = vmatprep.subr.bf16.mxu0 0
        %523 = vmatpush1.bf16.xpose.msra.mxu0 0
        %524 = vmatprep.subr.bf16.mxu0 0
        %525 = vmatpush1.bf16.xpose.msra.mxu0 0
        %526 = vmatprep.subr.bf16.mxu0 0
        %527 = vmatpush1.bf16.xpose.msra.mxu0 0
        %528 = vmatprep.subr.bf16.mxu0 0
        %529 = vmatpush1.bf16.xpose.msra.mxu0 0
        %530 = vmatprep.subr.bf16.mxu0 0
        %531 = vmatpush1.bf16.xpose.msra.mxu0 0
        %532 = vmatprep.subr.bf16.mxu0 0
        %533 = vmatpush1.bf16.xpose.msra.mxu0 0
        %534 = vmatprep.subr.bf16.mxu0 0
        %535 = vmatpush1.bf16.xpose.msra.mxu0 0
        %536 = vmatprep.subr.bf16.mxu0 0
        %537 = vmatpush1.bf16.xpose.msra.mxu0 0
        %538 = vmatprep.subr.bf16.mxu0 0
        %539 = vmatpush1.bf16.xpose.msra.mxu0 0
        %540 = vmatprep.mubr.bf16.mxu0 0
        %541 = vmatmul.mubr.bf16.gmra.mrb[0].mxu0 %v503
        %v542 = vpop.f32.mrb[0].mxu0
        %v543 = vadd.f32 0.0, %v542
        %v544 = vpop.f32.mrb[0].mxu0
        %v545 = vpop.f32.mrb[0].mxu0
        %v546 = vpop.f32.mrb[0].mxu0
        %547 = vdwg.mxu0
        %v548 = vsel %vm325, %v543, -inf
        %549 = vmax.xlane.f32.xlu0 %v548
        %v550 = vpop.xlane.xlu0 %549
        %v551 = vsub.f32 %v543, %v550
        %v552 = vmul.f32 %v551, 1.442695
        %v553 = vpow.pop %v552
        %v554 = vsel %vm325, %v553, 0.0
        %555 = vadd.xlane.f32.xlu0 %v554
        %v556 = vpop.xlane.xlu0 %555
        %v557 = vrcp.pop %v556
        %v558 = vmul.f32 %v553, %v557
        %v559 = vpack.c.bf16 %v558, %v558
        %560 = vrot.lane.b32.xlu0 %v274, 56
        %v561 = vpop.permute.xlu0 %560
        %v563 = vsel %vm325, %v559, 0
        %v566 = vsel %vm343, %v561, 0
        %568 = vmatprep.subr.bf16.mxu0 0
        %569 = vmatpush1.bf16.msra.mxu0 %v566
        %570 = vmatprep.subr.bf16.mxu0 0
        %571 = vmatpush1.bf16.msra.mxu0 0
        %572 = vmatprep.subr.bf16.mxu0 0
        %573 = vmatpush1.bf16.msra.mxu0 0
        %574 = vmatprep.subr.bf16.mxu0 0
        %575 = vmatpush1.bf16.msra.mxu0 0
        %576 = vmatprep.subr.bf16.mxu0 0
        %577 = vmatpush1.bf16.msra.mxu0 0
        %578 = vmatprep.subr.bf16.mxu0 0
        %579 = vmatpush1.bf16.msra.mxu0 0
        %580 = vmatprep.subr.bf16.mxu0 0
        %581 = vmatpush1.bf16.msra.mxu0 0
        %582 = vmatprep.subr.bf16.mxu0 0
        %583 = vmatpush1.bf16.msra.mxu0 0
        %584 = vmatprep.subr.bf16.mxu0 0
        %585 = vmatpush1.bf16.msra.mxu0 0
        %586 = vmatprep.subr.bf16.mxu0 0
        %587 = vmatpush1.bf16.msra.mxu0 0
        %588 = vmatprep.subr.bf16.mxu0 0
        %589 = vmatpush1.bf16.msra.mxu0 0
        %590 = vmatprep.subr.bf16.mxu0 0
        %591 = vmatpush1.bf16.msra.mxu0 0
        %592 = vmatprep.subr.bf16.mxu0 0
        %593 = vmatpush1.bf16.msra.mxu0 0
        %594 = vmatprep.subr.bf16.mxu0 0
        %595 = vmatpush1.bf16.msra.mxu0 0
        %596 = vmatprep.subr.bf16.mxu0 0
        %597 = vmatpush1.bf16.msra.mxu0 0
        %598 = vmatprep.subr.bf16.mxu0 0
        %599 = vmatpush1.bf16.msra.mxu0 0
        %600 = vmatprep.mubr.bf16.mxu0 0
        %601 = vmatmul.mubr.bf16.gmra.mrb[0].mxu0 %v563
        %v602 = vpop.f32.mrb[0].mxu0
        %v603 = vadd.f32 0.0, %v602
        %v604 = vpop.f32.mrb[0].mxu0
        %v605 = vpop.f32.mrb[0].mxu0
        %v606 = vpop.f32.mrb[0].mxu0
        %607 = vdwg.mxu0
        %608 = vrot.lane.b32.xlu0 %v273, 116
        %v609 = vpop.permute.xlu0 %608
        %610 = vrot.lane.b32.xlu0 %v274, 84
        %v611 = vpop.permute.xlu0 %610
        %v613 = vsel %vm278, %v609, 0
        %v616 = vsel %vm278, %v611, 0
        %618 = vmatprep.subr.bf16.mxu0 0
        %619 = vmatpush1.bf16.xpose.msra.mxu0 %v616
        %620 = vmatprep.subr.bf16.mxu0 0
        %621 = vmatpush1.bf16.xpose.msra.mxu0 0
        %622 = vmatprep.subr.bf16.mxu0 0
        %623 = vmatpush1.bf16.xpose.msra.mxu0 0
        %624 = vmatprep.subr.bf16.mxu0 0
        %625 = vmatpush1.bf16.xpose.msra.mxu0 0
        %626 = vmatprep.subr.bf16.mxu0 0
        %627 = vmatpush1.bf16.xpose.msra.mxu0 0
        %628 = vmatprep.subr.bf16.mxu0 0
        %629 = vmatpush1.bf16.xpose.msra.mxu0 0
        %630 = vmatprep.subr.bf16.mxu0 0
        %631 = vmatpush1.bf16.xpose.msra.mxu0 0
        %632 = vmatprep.subr.bf16.mxu0 0
        %633 = vmatpush1.bf16.xpose.msra.mxu0 0
        %634 = vmatprep.subr.bf16.mxu0 0
        %635 = vmatpush1.bf16.xpose.msra.mxu0 0
        %636 = vmatprep.subr.bf16.mxu0 0
        %637 = vmatpush1.bf16.xpose.msra.mxu0 0
        %638 = vmatprep.subr.bf16.mxu0 0
        %639 = vmatpush1.bf16.xpose.msra.mxu0 0
        %640 = vmatprep.subr.bf16.mxu0 0
        %641 = vmatpush1.bf16.xpose.msra.mxu0 0
        %642 = vmatprep.subr.bf16.mxu0 0
        %643 = vmatpush1.bf16.xpose.msra.mxu0 0
        %644 = vmatprep.subr.bf16.mxu0 0
        %645 = vmatpush1.bf16.xpose.msra.mxu0 0
        %646 = vmatprep.subr.bf16.mxu0 0
        %647 = vmatpush1.bf16.xpose.msra.mxu0 0
        %648 = vmatprep.subr.bf16.mxu0 0
        %649 = vmatpush1.bf16.xpose.msra.mxu0 0
        %650 = vmatprep.mubr.bf16.mxu0 0
        %651 = vmatmul.mubr.bf16.gmra.mrb[0].mxu0 %v613
        %v652 = vpop.f32.mrb[0].mxu0
        %v653 = vadd.f32 0.0, %v652
        %v654 = vpop.f32.mrb[0].mxu0
        %v655 = vpop.f32.mrb[0].mxu0
        %v656 = vpop.f32.mrb[0].mxu0
        %657 = vdwg.mxu0
        %v658 = vsel %vm325, %v653, -inf
        %659 = vmax.xlane.f32.xlu0 %v658
        %v660 = vpop.xlane.xlu0 %659
        %v661 = vsub.f32 %v653, %v660
        %v662 = vmul.f32 %v661, 1.442695
        %v663 = vpow.pop %v662
        %v664 = vsel %vm325, %v663, 0.0
        %665 = vadd.xlane.f32.xlu0 %v664
        %v666 = vpop.xlane.xlu0 %665
        %v667 = vrcp.pop %v666
        %v668 = vmul.f32 %v663, %v667
        %v669 = vpack.c.bf16 %v668, %v668
        %670 = vrot.lane.b32.xlu0 %v274, 52
        %v671 = vpop.permute.xlu0 %670
        %v673 = vsel %vm325, %v669, 0
        %v676 = vsel %vm343, %v671, 0
        %678 = vmatprep.subr.bf16.mxu0 0
        %679 = vmatpush1.bf16.msra.mxu0 %v676
        %680 = vmatprep.subr.bf16.mxu0 0
        %681 = vmatpush1.bf16.msra.mxu0 0
        %682 = vmatprep.subr.bf16.mxu0 0
        %683 = vmatpush1.bf16.msra.mxu0 0
        %684 = vmatprep.subr.bf16.mxu0 0
        %685 = vmatpush1.bf16.msra.mxu0 0
        %686 = vmatprep.subr.bf16.mxu0 0
        %687 = vmatpush1.bf16.msra.mxu0 0
        %688 = vmatprep.subr.bf16.mxu0 0
        %689 = vmatpush1.bf16.msra.mxu0 0
        %690 = vmatprep.subr.bf16.mxu0 0
        %691 = vmatpush1.bf16.msra.mxu0 0
        %692 = vmatprep.subr.bf16.mxu0 0
        %693 = vmatpush1.bf16.msra.mxu0 0
        %694 = vmatprep.subr.bf16.mxu0 0
        %695 = vmatpush1.bf16.msra.mxu0 0
        %696 = vmatprep.subr.bf16.mxu0 0
        %697 = vmatpush1.bf16.msra.mxu0 0
        %698 = vmatprep.subr.bf16.mxu0 0
        %699 = vmatpush1.bf16.msra.mxu0 0
        %700 = vmatprep.subr.bf16.mxu0 0
        %701 = vmatpush1.bf16.msra.mxu0 0
        %702 = vmatprep.subr.bf16.mxu0 0
        %703 = vmatpush1.bf16.msra.mxu0 0
        %704 = vmatprep.subr.bf16.mxu0 0
        %705 = vmatpush1.bf16.msra.mxu0 0
        %706 = vmatprep.subr.bf16.mxu0 0
        %707 = vmatpush1.bf16.msra.mxu0 0
        %708 = vmatprep.subr.bf16.mxu0 0
        %709 = vmatpush1.bf16.msra.mxu0 0
        %710 = vmatprep.mubr.bf16.mxu0 0
        %711 = vmatmul.mubr.bf16.gmra.mrb[0].mxu0 %v673
        %v712 = vpop.f32.mrb[0].mxu0
        %v713 = vadd.f32 0.0, %v712
        %v714 = vpop.f32.mrb[0].mxu0
        %v715 = vpop.f32.mrb[0].mxu0
        %v716 = vpop.f32.mrb[0].mxu0
        %717 = vdwg.mxu0
        %718 = vrot.lane.b32.xlu0 %v273, 112
        %v719 = vpop.permute.xlu0 %718
        %720 = vrot.lane.b32.xlu0 %v274, 80
        %v721 = vpop.permute.xlu0 %720
        %v723 = vsel %vm278, %v719, 0
        %v726 = vsel %vm278, %v721, 0
        %728 = vmatprep.subr.bf16.mxu0 0
        %729 = vmatpush1.bf16.xpose.msra.mxu0 %v726
        %730 = vmatprep.subr.bf16.mxu0 0
        %731 = vmatpush1.bf16.xpose.msra.mxu0 0
        %732 = vmatprep.subr.bf16.mxu0 0
        %733 = vmatpush1.bf16.xpose.msra.mxu0 0
        %734 = vmatprep.subr.bf16.mxu0 0
        %735 = vmatpush1.bf16.xpose.msra.mxu0 0
        %736 = vmatprep.subr.bf16.mxu0 0
        %737 = vmatpush1.bf16.xpose.msra.mxu0 0
        %738 = vmatprep.subr.bf16.mxu0 0
        %739 = vmatpush1.bf16.xpose.msra.mxu0 0
        %740 = vmatprep.subr.bf16.mxu0 0
        %741 = vmatpush1.bf16.xpose.msra.mxu0 0
        %742 = vmatprep.subr.bf16.mxu0 0
        %743 = vmatpush1.bf16.xpose.msra.mxu0 0
        %744 = vmatprep.subr.bf16.mxu0 0
        %745 = vmatpush1.bf16.xpose.msra.mxu0 0
        %746 = vmatprep.subr.bf16.mxu0 0
        %747 = vmatpush1.bf16.xpose.msra.mxu0 0
        %748 = vmatprep.subr.bf16.mxu0 0
        %749 = vmatpush1.bf16.xpose.msra.mxu0 0
        %750 = vmatprep.subr.bf16.mxu0 0
        %751 = vmatpush1.bf16.xpose.msra.mxu0 0
        %752 = vmatprep.subr.bf16.mxu0 0
        %753 = vmatpush1.bf16.xpose.msra.mxu0 0
        %754 = vmatprep.subr.bf16.mxu0 0
        %755 = vmatpush1.bf16.xpose.msra.mxu0 0
        %756 = vmatprep.subr.bf16.mxu0 0
        %757 = vmatpush1.bf16.xpose.msra.mxu0 0
        %758 = vmatprep.subr.bf16.mxu0 0
        %759 = vmatpush1.bf16.xpose.msra.mxu0 0
        %760 = vmatprep.mubr.bf16.mxu0 0
        %761 = vmatmul.mubr.bf16.gmra.mrb[0].mxu0 %v723
        %v762 = vpop.f32.mrb[0].mxu0
        %v763 = vadd.f32 0.0, %v762
        %v764 = vpop.f32.mrb[0].mxu0
        %v765 = vpop.f32.mrb[0].mxu0
        %v766 = vpop.f32.mrb[0].mxu0
        %767 = vdwg.mxu0
        %v768 = vsel %vm325, %v763, -inf
        %769 = vmax.xlane.f32.xlu0 %v768
        %v770 = vpop.xlane.xlu0 %769
        %v771 = vsub.f32 %v763, %v770
        %v772 = vmul.f32 %v771, 1.442695
        %v773 = vpow.pop %v772
        %v774 = vsel %vm325, %v773, 0.0
        %775 = vadd.xlane.f32.xlu0 %v774
        %v776 = vpop.xlane.xlu0 %775
        %v777 = vrcp.pop %v776
        %v778 = vmul.f32 %v773, %v777
        %v779 = vpack.c.bf16 %v778, %v778
        %780 = vrot.lane.b32.xlu0 %v274, 48
        %v781 = vpop.permute.xlu0 %780
        %v783 = vsel %vm325, %v779, 0
        %v786 = vsel %vm343, %v781, 0
        %788 = vmatprep.subr.bf16.mxu0 0
        %789 = vmatpush1.bf16.msra.mxu0 %v786
        %790 = vmatprep.subr.bf16.mxu0 0
        %791 = vmatpush1.bf16.msra.mxu0 0
        %792 = vmatprep.subr.bf16.mxu0 0
        %793 = vmatpush1.bf16.msra.mxu0 0
        %794 = vmatprep.subr.bf16.mxu0 0
        %795 = vmatpush1.bf16.msra.mxu0 0
        %796 = vmatprep.subr.bf16.mxu0 0
        %797 = vmatpush1.bf16.msra.mxu0 0
        %798 = vmatprep.subr.bf16.mxu0 0
        %799 = vmatpush1.bf16.msra.mxu0 0
        %800 = vmatprep.subr.bf16.mxu0 0
        %801 = vmatpush1.bf16.msra.mxu0 0
        %802 = vmatprep.subr.bf16.mxu0 0
        %803 = vmatpush1.bf16.msra.mxu0 0
        %804 = vmatprep.subr.bf16.mxu0 0
        %805 = vmatpush1.bf16.msra.mxu0 0
        %806 = vmatprep.subr.bf16.mxu0 0
        %807 = vmatpush1.bf16.msra.mxu0 0
        %808 = vmatprep.subr.bf16.mxu0 0
        %809 = vmatpush1.bf16.msra.mxu0 0
        %810 = vmatprep.subr.bf16.mxu0 0
        %811 = vmatpush1.bf16.msra.mxu0 0
        %812 = vmatprep.subr.bf16.mxu0 0
        %813 = vmatpush1.bf16.msra.mxu0 0
        %814 = vmatprep.subr.bf16.mxu0 0
        %815 = vmatpush1.bf16.msra.mxu0 0
        %816 = vmatprep.subr.bf16.mxu0 0
        %817 = vmatpush1.bf16.msra.mxu0 0
        %818 = vmatprep.subr.bf16.mxu0 0
        %819 = vmatpush1.bf16.msra.mxu0 0
        %820 = vmatprep.mubr.bf16.mxu0 0
        %821 = vmatmul.mubr.bf16.gmra.mrb[0].mxu0 %v783
        %v822 = vpop.f32.mrb[0].mxu0
        %v823 = vadd.f32 0.0, %v822
        %v824 = vpop.f32.mrb[0].mxu0
        %v825 = vpop.f32.mrb[0].mxu0
        %v826 = vpop.f32.mrb[0].mxu0
        %827 = vdwg.mxu0
        %828 = vrot.lane.b32.xlu0 %v273, 108
        %v829 = vpop.permute.xlu0 %828
        %830 = vrot.lane.b32.xlu0 %v274, 76
        %v831 = vpop.permute.xlu0 %830
        %v833 = vsel %vm278, %v829, 0
        %v836 = vsel %vm278, %v831, 0
        %838 = vmatprep.subr.bf16.mxu0 0
        %839 = vmatpush1.bf16.xpose.msra.mxu0 %v836
        %840 = vmatprep.subr.bf16.mxu0 0
        %841 = vmatpush1.bf16.xpose.msra.mxu0 0
        %842 = vmatprep.subr.bf16.mxu0 0
        %843 = vmatpush1.bf16.xpose.msra.mxu0 0
        %844 = vmatprep.subr.bf16.mxu0 0
        %845 = vmatpush1.bf16.xpose.msra.mxu0 0
        %846 = vmatprep.subr.bf16.mxu0 0
        %847 = vmatpush1.bf16.xpose.msra.mxu0 0
        %848 = vmatprep.subr.bf16.mxu0 0
        %849 = vmatpush1.bf16.xpose.msra.mxu0 0
        %850 = vmatprep.subr.bf16.mxu0 0
        %851 = vmatpush1.bf16.xpose.msra.mxu0 0
        %852 = vmatprep.subr.bf16.mxu0 0
        %853 = vmatpush1.bf16.xpose.msra.mxu0 0
        %854 = vmatprep.subr.bf16.mxu0 0
        %855 = vmatpush1.bf16.xpose.msra.mxu0 0
        %856 = vmatprep.subr.bf16.mxu0 0
        %857 = vmatpush1.bf16.xpose.msra.mxu0 0
        %858 = vmatprep.subr.bf16.mxu0 0
        %859 = vmatpush1.bf16.xpose.msra.mxu0 0
        %860 = vmatprep.subr.bf16.mxu0 0
        %861 = vmatpush1.bf16.xpose.msra.mxu0 0
        %862 = vmatprep.subr.bf16.mxu0 0
        %863 = vmatpush1.bf16.xpose.msra.mxu0 0
        %864 = vmatprep.subr.bf16.mxu0 0
        %865 = vmatpush1.bf16.xpose.msra.mxu0 0
        %866 = vmatprep.subr.bf16.mxu0 0
        %867 = vmatpush1.bf16.xpose.msra.mxu0 0
        %868 = vmatprep.subr.bf16.mxu0 0
        %869 = vmatpush1.bf16.xpose.msra.mxu0 0
        %870 = vmatprep.mubr.bf16.mxu0 0
        %871 = vmatmul.mubr.bf16.gmra.mrb[0].mxu0 %v833
        %v872 = vpop.f32.mrb[0].mxu0
        %v873 = vadd.f32 0.0, %v872
        %v874 = vpop.f32.mrb[0].mxu0
        %v875 = vpop.f32.mrb[0].mxu0
        %v876 = vpop.f32.mrb[0].mxu0
        %877 = vdwg.mxu0
        %v878 = vsel %vm325, %v873, -inf
        %879 = vmax.xlane.f32.xlu0 %v878
        %v880 = vpop.xlane.xlu0 %879
        %v881 = vsub.f32 %v873, %v880
        %v882 = vmul.f32 %v881, 1.442695
        %v883 = vpow.pop %v882
        %v884 = vsel %vm325, %v883, 0.0
        %885 = vadd.xlane.f32.xlu0 %v884
        %v886 = vpop.xlane.xlu0 %885
        %v887 = vrcp.pop %v886
        %v888 = vmul.f32 %v883, %v887
        %v889 = vpack.c.bf16 %v888, %v888
        %890 = vrot.lane.b32.xlu0 %v274, 44
        %v891 = vpop.permute.xlu0 %890
        %v893 = vsel %vm325, %v889, 0
        %v896 = vsel %vm343, %v891, 0
        %898 = vmatprep.subr.bf16.mxu0 0
        %899 = vmatpush1.bf16.msra.mxu0 %v896
        %900 = vmatprep.subr.bf16.mxu0 0
        %901 = vmatpush1.bf16.msra.mxu0 0
        %902 = vmatprep.subr.bf16.mxu0 0
        %903 = vmatpush1.bf16.msra.mxu0 0
        %904 = vmatprep.subr.bf16.mxu0 0
        %905 = vmatpush1.bf16.msra.mxu0 0
        %906 = vmatprep.subr.bf16.mxu0 0
        %907 = vmatpush1.bf16.msra.mxu0 0
        %908 = vmatprep.subr.bf16.mxu0 0
        %909 = vmatpush1.bf16.msra.mxu0 0
        %910 = vmatprep.subr.bf16.mxu0 0
        %911 = vmatpush1.bf16.msra.mxu0 0
        %912 = vmatprep.subr.bf16.mxu0 0
        %913 = vmatpush1.bf16.msra.mxu0 0
        %914 = vmatprep.subr.bf16.mxu0 0
        %915 = vmatpush1.bf16.msra.mxu0 0
        %916 = vmatprep.subr.bf16.mxu0 0
        %917 = vmatpush1.bf16.msra.mxu0 0
        %918 = vmatprep.subr.bf16.mxu0 0
        %919 = vmatpush1.bf16.msra.mxu0 0
        %920 = vmatprep.subr.bf16.mxu0 0
        %921 = vmatpush1.bf16.msra.mxu0 0
        %922 = vmatprep.subr.bf16.mxu0 0
        %923 = vmatpush1.bf16.msra.mxu0 0
        %924 = vmatprep.subr.bf16.mxu0 0
        %925 = vmatpush1.bf16.msra.mxu0 0
        %926 = vmatprep.subr.bf16.mxu0 0
        %927 = vmatpush1.bf16.msra.mxu0 0
        %928 = vmatprep.subr.bf16.mxu0 0
        %929 = vmatpush1.bf16.msra.mxu0 0
        %930 = vmatprep.mubr.bf16.mxu0 0
        %931 = vmatmul.mubr.bf16.gmra.mrb[0].mxu0 %v893
        %v932 = vpop.f32.mrb[0].mxu0
        %v933 = vadd.f32 0.0, %v932
        %v934 = vpop.f32.mrb[0].mxu0
        %v935 = vpop.f32.mrb[0].mxu0
        %v936 = vpop.f32.mrb[0].mxu0
        %937 = vdwg.mxu0
        %938 = vrot.lane.b32.xlu0 %v273, 104
        %v939 = vpop.permute.xlu0 %938
        %940 = vrot.lane.b32.xlu0 %v274, 72
        %v941 = vpop.permute.xlu0 %940
        %v943 = vsel %vm278, %v939, 0
        %v946 = vsel %vm278, %v941, 0
        %948 = vmatprep.subr.bf16.mxu0 0
        %949 = vmatpush1.bf16.xpose.msra.mxu0 %v946
        %950 = vmatprep.subr.bf16.mxu0 0
        %951 = vmatpush1.bf16.xpose.msra.mxu0 0
        %952 = vmatprep.subr.bf16.mxu0 0
        %953 = vmatpush1.bf16.xpose.msra.mxu0 0
        %954 = vmatprep.subr.bf16.mxu0 0
        %955 = vmatpush1.bf16.xpose.msra.mxu0 0
        %956 = vmatprep.subr.bf16.mxu0 0
        %957 = vmatpush1.bf16.xpose.msra.mxu0 0
        %958 = vmatprep.subr.bf16.mxu0 0
        %959 = vmatpush1.bf16.xpose.msra.mxu0 0
        %960 = vmatprep.subr.bf16.mxu0 0
        %961 = vmatpush1.bf16.xpose.msra.mxu0 0
        %962 = vmatprep.subr.bf16.mxu0 0
        %963 = vmatpush1.bf16.xpose.msra.mxu0 0
        %964 = vmatprep.subr.bf16.mxu0 0
        %965 = vmatpush1.bf16.xpose.msra.mxu0 0
        %966 = vmatprep.subr.bf16.mxu0 0
        %967 = vmatpush1.bf16.xpose.msra.mxu0 0
        %968 = vmatprep.subr.bf16.mxu0 0
        %969 = vmatpush1.bf16.xpose.msra.mxu0 0
        %970 = vmatprep.subr.bf16.mxu0 0
        %971 = vmatpush1.bf16.xpose.msra.mxu0 0
        %972 = vmatprep.subr.bf16.mxu0 0
        %973 = vmatpush1.bf16.xpose.msra.mxu0 0
        %974 = vmatprep.subr.bf16.mxu0 0
        %975 = vmatpush1.bf16.xpose.msra.mxu0 0
        %976 = vmatprep.subr.bf16.mxu0 0
        %977 = vmatpush1.bf16.xpose.msra.mxu0 0
        %978 = vmatprep.subr.bf16.mxu0 0
        %979 = vmatpush1.bf16.xpose.msra.mxu0 0
        %980 = vmatprep.mubr.bf16.mxu0 0
        %981 = vmatmul.mubr.bf16.gmra.mrb[0].mxu0 %v943
        %v982 = vpop.f32.mrb[0].mxu0
        %v983 = vadd.f32 0.0, %v982
        %v984 = vpop.f32.mrb[0].mxu0
        %v985 = vpop.f32.mrb[0].mxu0
        %v986 = vpop.f32.mrb[0].mxu0
        %987 = vdwg.mxu0
        %v988 = vsel %vm325, %v983, -inf
        %989 = vmax.xlane.f32.xlu0 %v988
        %v990 = vpop.xlane.xlu0 %989
        %v991 = vsub.f32 %v983, %v990
        %v992 = vmul.f32 %v991, 1.442695
        %v993 = vpow.pop %v992
        %v994 = vsel %vm325, %v993, 0.0
        %995 = vadd.xlane.f32.xlu0 %v994
        %v996 = vpop.xlane.xlu0 %995
        %v997 = vrcp.pop %v996
        %v998 = vmul.f32 %v993, %v997
        %v999 = vpack.c.bf16 %v998, %v998
        %1000 = vrot.lane.b32.xlu0 %v274, 40
        %v1001 = vpop.permute.xlu0 %1000
        %v1003 = vsel %vm325, %v999, 0
        %v1006 = vsel %vm343, %v1001, 0
        %1008 = vmatprep.subr.bf16.mxu0 0
        %1009 = vmatpush1.bf16.msra.mxu0 %v1006
        %1010 = vmatprep.subr.bf16.mxu0 0
        %1011 = vmatpush1.bf16.msra.mxu0 0
        %1012 = vmatprep.subr.bf16.mxu0 0
        %1013 = vmatpush1.bf16.msra.mxu0 0
        %1014 = vmatprep.subr.bf16.mxu0 0
        %1015 = vmatpush1.bf16.msra.mxu0 0
        %1016 = vmatprep.subr.bf16.mxu0 0
        %1017 = vmatpush1.bf16.msra.mxu0 0
        %1018 = vmatprep.subr.bf16.mxu0 0
        %1019 = vmatpush1.bf16.msra.mxu0 0
        %1020 = vmatprep.subr.bf16.mxu0 0
        %1021 = vmatpush1.bf16.msra.mxu0 0
        %1022 = vmatprep.subr.bf16.mxu0 0
        %1023 = vmatpush1.bf16.msra.mxu0 0
        %1024 = vmatprep.subr.bf16.mxu0 0
        %1025 = vmatpush1.bf16.msra.mxu0 0
        %1026 = vmatprep.subr.bf16.mxu0 0
        %1027 = vmatpush1.bf16.msra.mxu0 0
        %1028 = vmatprep.subr.bf16.mxu0 0
        %1029 = vmatpush1.bf16.msra.mxu0 0
        %1030 = vmatprep.subr.bf16.mxu0 0
        %1031 = vmatpush1.bf16.msra.mxu0 0
        %1032 = vmatprep.subr.bf16.mxu0 0
        %1033 = vmatpush1.bf16.msra.mxu0 0
        %1034 = vmatprep.subr.bf16.mxu0 0
        %1035 = vmatpush1.bf16.msra.mxu0 0
        %1036 = vmatprep.subr.bf16.mxu0 0
        %1037 = vmatpush1.bf16.msra.mxu0 0
        %1038 = vmatprep.subr.bf16.mxu0 0
        %1039 = vmatpush1.bf16.msra.mxu0 0
        %1040 = vmatprep.mubr.bf16.mxu0 0
        %1041 = vmatmul.mubr.bf16.gmra.mrb[0].mxu0 %v1003
        %v1042 = vpop.f32.mrb[0].mxu0
        %v1043 = vadd.f32 0.0, %v1042
        %v1044 = vpop.f32.mrb[0].mxu0
        %v1045 = vpop.f32.mrb[0].mxu0
        %v1046 = vpop.f32.mrb[0].mxu0
        %1047 = vdwg.mxu0
        %1048 = vrot.lane.b32.xlu0 %v273, 100
        %v1049 = vpop.permute.xlu0 %1048
        %1050 = vrot.lane.b32.xlu0 %v274, 68
        %v1051 = vpop.permute.xlu0 %1050
        %v1053 = vsel %vm278, %v1049, 0
        %v1056 = vsel %vm278, %v1051, 0
        %1058 = vmatprep.subr.bf16.mxu0 0
        %1059 = vmatpush1.bf16.xpose.msra.mxu0 %v1056
        %1060 = vmatprep.subr.bf16.mxu0 0
        %1061 = vmatpush1.bf16.xpose.msra.mxu0 0
        %1062 = vmatprep.subr.bf16.mxu0 0
        %1063 = vmatpush1.bf16.xpose.msra.mxu0 0
        %1064 = vmatprep.subr.bf16.mxu0 0
        %1065 = vmatpush1.bf16.xpose.msra.mxu0 0
        %1066 = vmatprep.subr.bf16.mxu0 0
        %1067 = vmatpush1.bf16.xpose.msra.mxu0 0
        %1068 = vmatprep.subr.bf16.mxu0 0
        %1069 = vmatpush1.bf16.xpose.msra.mxu0 0
        %1070 = vmatprep.subr.bf16.mxu0 0
        %1071 = vmatpush1.bf16.xpose.msra.mxu0 0
        %1072 = vmatprep.subr.bf16.mxu0 0
        %1073 = vmatpush1.bf16.xpose.msra.mxu0 0
        %1074 = vmatprep.subr.bf16.mxu0 0
        %1075 = vmatpush1.bf16.xpose.msra.mxu0 0
        %1076 = vmatprep.subr.bf16.mxu0 0
        %1077 = vmatpush1.bf16.xpose.msra.mxu0 0
        %1078 = vmatprep.subr.bf16.mxu0 0
        %1079 = vmatpush1.bf16.xpose.msra.mxu0 0
        %1080 = vmatprep.subr.bf16.mxu0 0
        %1081 = vmatpush1.bf16.xpose.msra.mxu0 0
        %1082 = vmatprep.subr.bf16.mxu0 0
        %1083 = vmatpush1.bf16.xpose.msra.mxu0 0
        %1084 = vmatprep.subr.bf16.mxu0 0
        %1085 = vmatpush1.bf16.xpose.msra.mxu0 0
        %1086 = vmatprep.subr.bf16.mxu0 0
        %1087 = vmatpush1.bf16.xpose.msra.mxu0 0
        %1088 = vmatprep.subr.bf16.mxu0 0
        %1089 = vmatpush1.bf16.xpose.msra.mxu0 0
        %1090 = vmatprep.mubr.bf16.mxu0 0
        %1091 = vmatmul.mubr.bf16.gmra.mrb[0].mxu0 %v1053
        %v1092 = vpop.f32.mrb[0].mxu0
        %v1093 = vadd.f32 0.0, %v1092
        %v1094 = vpop.f32.mrb[0].mxu0
        %v1095 = vpop.f32.mrb[0].mxu0
        %v1096 = vpop.f32.mrb[0].mxu0
        %1097 = vdwg.mxu0
        %v1098 = vsel %vm325, %v1093, -inf
        %1099 = vmax.xlane.f32.xlu0 %v1098
        %v1100 = vpop.xlane.xlu0 %1099
        %v1101 = vsub.f32 %v1093, %v1100
        %v1102 = vmul.f32 %v1101, 1.442695
        %v1103 = vpow.pop %v1102
        %v1104 = vsel %vm325, %v1103, 0.0
        %1105 = vadd.xlane.f32.xlu0 %v1104
        %v1106 = vpop.xlane.xlu0 %1105
        %v1107 = vrcp.pop %v1106
        %v1108 = vmul.f32 %v1103, %v1107
        %v1109 = vpack.c.bf16 %v1108, %v1108
        %1110 = vrot.lane.b32.xlu0 %v274, 36
        %v1111 = vpop.permute.xlu0 %1110
        %v1113 = vsel %vm325, %v1109, 0
        %v1116 = vsel %vm343, %v1111, 0
        %1118 = vmatprep.subr.bf16.mxu0 0
        %1119 = vmatpush1.bf16.msra.mxu0 %v1116
        %1120 = vmatprep.subr.bf16.mxu0 0
        %1121 = vmatpush1.bf16.msra.mxu0 0
        %1122 = vmatprep.subr.bf16.mxu0 0
        %1123 = vmatpush1.bf16.msra.mxu0 0
        %1124 = vmatprep.subr.bf16.mxu0 0
        %1125 = vmatpush1.bf16.msra.mxu0 0
        %1126 = vmatprep.subr.bf16.mxu0 0
        %1127 = vmatpush1.bf16.msra.mxu0 0
        %1128 = vmatprep.subr.bf16.mxu0 0
        %1129 = vmatpush1.bf16.msra.mxu0 0
        %1130 = vmatprep.subr.bf16.mxu0 0
        %1131 = vmatpush1.bf16.msra.mxu0 0
        %1132 = vmatprep.subr.bf16.mxu0 0
        %1133 = vmatpush1.bf16.msra.mxu0 0
        %1134 = vmatprep.subr.bf16.mxu0 0
        %1135 = vmatpush1.bf16.msra.mxu0 0
        %1136 = vmatprep.subr.bf16.mxu0 0
        %1137 = vmatpush1.bf16.msra.mxu0 0
        %1138 = vmatprep.subr.bf16.mxu0 0
        %1139 = vmatpush1.bf16.msra.mxu0 0
        %1140 = vmatprep.subr.bf16.mxu0 0
        %1141 = vmatpush1.bf16.msra.mxu0 0
        %1142 = vmatprep.subr.bf16.mxu0 0
        %1143 = vmatpush1.bf16.msra.mxu0 0
        %1144 = vmatprep.subr.bf16.mxu0 0
        %1145 = vmatpush1.bf16.msra.mxu0 0
        %1146 = vmatprep.subr.bf16.mxu0 0
        %1147 = vmatpush1.bf16.msra.mxu0 0
        %1148 = vmatprep.subr.bf16.mxu0 0
        %1149 = vmatpush1.bf16.msra.mxu0 0
        %1150 = vmatprep.mubr.bf16.mxu0 0
        %1151 = vmatmul.mubr.bf16.gmra.mrb[0].mxu0 %v1113
        %v1152 = vpop.f32.mrb[0].mxu0
        %v1153 = vadd.f32 0.0, %v1152
        %v1154 = vpop.f32.mrb[0].mxu0
        %v1155 = vpop.f32.mrb[0].mxu0
        %v1156 = vpop.f32.mrb[0].mxu0
        %1157 = vdwg.mxu0
        %1159 = vrot.lane.b32.xlu0 %v493, 4
        %v1160 = vpop.permute.xlu0 %1159
        %1163 = vrot.lane.b32.xlu0 %v603, 8
        %v1164 = vpop.permute.xlu0 %1163
        %1167 = vrot.lane.b32.xlu0 %v713, 12
        %v1168 = vpop.permute.xlu0 %1167
        %1171 = vrot.lane.b32.xlu0 %v823, 16
        %v1172 = vpop.permute.xlu0 %1171
        %1175 = vrot.lane.b32.xlu0 %v933, 20
        %v1176 = vpop.permute.xlu0 %1175
        %1179 = vrot.lane.b32.xlu0 %v1043, 24
        %v1180 = vpop.permute.xlu0 %1179
        %1183 = vrot.lane.b32.xlu0 %v1153, 28
        %v1184 = vpop.permute.xlu0 %1183
        %v1186 = vsel %vm278, %v382, %v1160
        %v1187 = vsel %vm325, %v1186, %v1164
        %vm1188 = vcmask 97280
        %v1189 = vsel %vm1188, %v1187, %v1168
        %vm1190 = vcmask 130048
        %v1191 = vsel %vm1190, %v1189, %v1172
        %vm1192 = vcmask 162816
        %v1193 = vsel %vm1192, %v1191, %v1176
        %vm1194 = vcmask 195584
        %v1195 = vsel %vm1194, %v1193, %v1180
        %vm1196 = vcmask 228352
        %v1197 = vsel %vm1196, %v1195, %v1184
        %v1198 = vpack.c.bf16 %v1197, %v1197
        %v1199 = vld [vmem:[%s2] sm:$0xf]
        %v1200 = vld [vmem:[%s2 + $0x4] sm:$0xf]
        %v1201 = vld [vmem:[%s2 + $0x8] sm:$0xf]
        %v1202 = vld [vmem:[%s2 + $0xc] sm:$0xf]
        %v1207 = vunpack.c.l.b16 %v1199
        %v1208 = vunpack.c.l.b16 %v1200
        %v1209 = vunpack.c.l.b16 %v1201
        %v1210 = vunpack.c.l.b16 %v1202
        %v1211 = vpack.c.b16 %v1208, %v1207
        %v1212 = vpack.c.b16 %v1210, %v1209
        %v1214 = vsel %vm210, %v1198, 0
        %v1217 = vsel %vm210, %v1211, 0
        %v1220 = vsel %vm210, %v1212, 0
        %1222 = vmatprep.subr.bf16.mxu0 0
        %1223 = vmatpush1.bf16.xpose.msra.mxu0 %v1217
        %1224 = vmatprep.subr.bf16.mxu0 0
        %1225 = vmatpush1.bf16.xpose.msra.mxu0 %v1220
        %1226 = vmatprep.subr.bf16.mxu0 0
        %1227 = vmatpush1.bf16.xpose.msra.mxu0 0
        %1228 = vmatprep.subr.bf16.mxu0 0
        %1229 = vmatpush1.bf16.xpose.msra.mxu0 0
        %1230 = vmatprep.subr.bf16.mxu0 0
        %1231 = vmatpush1.bf16.xpose.msra.mxu0 0
        %1232 = vmatprep.subr.bf16.mxu0 0
        %1233 = vmatpush1.bf16.xpose.msra.mxu0 0
        %1234 = vmatprep.subr.bf16.mxu0 0
        %1235 = vmatpush1.bf16.xpose.msra.mxu0 0
        %1236 = vmatprep.subr.bf16.mxu0 0
        %1237 = vmatpush1.bf16.xpose.msra.mxu0 0
        %1238 = vmatprep.subr.bf16.mxu0 0
        %1239 = vmatpush1.bf16.xpose.msra.mxu0 0
        %1240 = vmatprep.subr.bf16.mxu0 0
        %1241 = vmatpush1.bf16.xpose.msra.mxu0 0
        %1242 = vmatprep.subr.bf16.mxu0 0
        %1243 = vmatpush1.bf16.xpose.msra.mxu0 0
        %1244 = vmatprep.subr.bf16.mxu0 0
        %1245 = vmatpush1.bf16.xpose.msra.mxu0 0
        %1246 = vmatprep.subr.bf16.mxu0 0
        %1247 = vmatpush1.bf16.xpose.msra.mxu0 0
        %1248 = vmatprep.subr.bf16.mxu0 0
        %1249 = vmatpush1.bf16.xpose.msra.mxu0 0
        %1250 = vmatprep.subr.bf16.mxu0 0
        %1251 = vmatpush1.bf16.xpose.msra.mxu0 0
        %1252 = vmatprep.subr.bf16.mxu0 0
        %1253 = vmatpush1.bf16.xpose.msra.mxu0 0
        %1254 = vmatprep.mubr.bf16.mxu0 0
        %1255 = vmatmul.mubr.bf16.gmra.mrb[0].mxu0 %v1214
        %v1256 = vpop.f32.mrb[0].mxu0
        %v1257 = vadd.f32 0.0, %v1256
        %v1258 = vpop.f32.mrb[0].mxu0
        %v1259 = vpop.f32.mrb[0].mxu0
        %v1260 = vpop.f32.mrb[0].mxu0
        %1261 = vdwg.mxu0
        %1262 = vst.msk [vmem:[%s161] sm:$0xff] %vm210, %v1257
        %s1263 = sand.u32 %s93, 1
        %s1264 = scalar_lea.sflag [#allocation3], %s1263
        %s1265 = sand.u32 %s93, 1
        %s1266 = smul.addr %s1265, 8
        %s1267 = scalar_lea.vmem [#allocation2], %s1266
        // Predicated region
        $region33: #{tpu_custom_call.1} parent=31 // pred_check
          %p1268 = pneg %p103
        $region34: #{tpu_custom_call.1} parent=31 // pred_check_branch
          %1270 = sbr.rel (%p1268) target = $region36
        $region35: #{tpu_custom_call.1} parent=31 // pred_region
          %s1272 = ssub.s32 128, 128
          %1273 = vsyncadd %s1264, %s1272
          %s1274 = smul.addr %s17, 128
          %s1275 = scalar_lea.hbm %s3, %s1274
          %s1277 = sshll.u32 %s1267, 4
          %s1278 = int_to_ptr.vmem [resolvable:$true] %s1277
          %1280 = dma.vmem_to_hbm [thread:$0]  %s1278, 128, %s1275, %s1264
        $region36: #{tpu_custom_call.1} parent=31 // pred_fallthru
          _
      $region32: #{tpu_custom_call.1} parent=5 // pred_fallthru
        _
      %p1281 = scmp.le.s32.totalorder 2, %s12
      // Predicated region
      $region37: #{tpu_custom_call.1} parent=5 // pred_check
        %p1282 = pneg %p1281
      $region38: #{tpu_custom_call.1} parent=5 // pred_check_branch
        %1284 = sbr.rel (%p1282) target = $region40
      $region39: #{tpu_custom_call.1} parent=5 // pred_region
        %s1285 = ssub.s32 %s12, 2
        // Predicated region
        $region41: #{tpu_custom_call.1} parent=39 // pred_check
          %p1286 = pneg %p109
        $region42: #{tpu_custom_call.1} parent=39 // pred_check_branch
          %1288 = sbr.rel (%p1286) target = $region44
        $region43: #{tpu_custom_call.1} parent=39 // pred_region
          %s1289 = sand.u32 %s94, 1
          %s1290 = scalar_lea.sflag [#allocation3], %s1289
          %s1291 = sand.u32 %s94, 1
          %s1292 = smul.addr %s1291, 8
          %s1293 = scalar_lea.vmem [#allocation2], %s1292
          %1294 = dma.done %s1290, 128
        $region44: #{tpu_custom_call.1} parent=39 // pred_fallthru
          _
      $region40: #{tpu_custom_call.1} parent=5 // pred_fallthru
        _
    $region6: #{tpu_custom_call.1} parent=1 // loop_footer
      %s16 = sadd.s32 1, %s12
    $region7: #{tpu_custom_call.1} parent=1 // loop_footer_branch
      %11 = sbr.rel target = $region3
    $region8: #{tpu_custom_call.1} parent=1 // loop_exit
      _
    %1295 = vsyncpa [#allocation3], 1
    %s1296 = scalar_lea.sflag [#allocation3], 1
    %1297 = vsyncpa %s1296, 1

</llo_original>
